<compile_context>
chip_gen: v6e
topology: v6e:2x2x1
jax: 0.10.0
libtpu: 0.0.40
codegen_flags: <defaults>
</compile_context>

<pallas_src>
import functools

import jax
import jax.numpy as jnp
from jax.experimental import pallas as pl
from jax.experimental.pallas import tpu as pltpu

HIDDEN = 768          # Linear2HEAD(768)
N_SENT = 4
N_CLAS = 10
N_HEADS = N_SENT + N_CLAS
HEAD_PAD = 128        # pad fused head output to a full 128-lane (lane-dense) store
LN_EPS = 1e-5         # nn.LayerNorm default


def _round_up(x, m):
    return (x + m - 1) // m * m


def _linear2head_kernel(x_ref, w1_ref, b1_ref, g_ref, beta_ref,
                        wh_ref, bh_ref, out_ref):
    # x tile [tb, H] -> bf16 for the MXU (accumulation stays f32).
    x = x_ref[...].astype(jnp.bfloat16)

    # fc_input: x @ W1 + b1   (W1 stored [in, out], bf16)
    h = jnp.dot(x, w1_ref[...], preferred_element_type=jnp.float32)    # [tb, H] f32
    h = h + b1_ref[...]                                                # broadcast [1, H]

    # SiLU: h * sigmoid(h).  exp and the approx reciprocal both go to the EUP slot.
    # (Switch approx=False if downstream calibration is sensitive; kernel is
    # mem-bound so the exact reciprocal would be essentially free.)
    h = h * pl.reciprocal(1.0 + jnp.exp(-h), approx=True)

    # LayerNorm over the hidden axis.
    mean = jnp.mean(h, axis=-1, keepdims=True)
    c = h - mean
    var = jnp.mean(c * c, axis=-1, keepdims=True)
    hn = c * jax.lax.rsqrt(var + LN_EPS)
    hn = hn * g_ref[...] + beta_ref[...]

    # Fused heads: one lane-dense 128-wide matmul (cols 0:4 = sent, 4:14 = clas,
    # remaining lanes are zero padding).
    heads = jnp.dot(hn.astype(jnp.bfloat16), wh_ref[...],
                    preferred_element_type=jnp.float32) + bh_ref[...]
    out_ref[...] = heads.astype(out_ref.dtype)


def prepack_linear2head_params(w1, b1, gamma, beta, ws, bs, wc, bc):
    """One-time packing of the Linear2HEAD parameters.

    Call this ONCE at init (outside the forward/jit path).  It casts W1 to bf16
    and fuses + 128-lane-pads the two head weights/biases so the per-step kernel
    reads pre-packed constants straight from HBM with no per-call XLA prep.
    """
    w1_bf = w1.astype(jnp.bfloat16)                                   # [H, H] bf16
    wh = jnp.concatenate([ws, wc], axis=1)                            # [H, 14]
    wh = jnp.pad(wh, ((0, 0), (0, HEAD_PAD - N_HEADS))).astype(jnp.bfloat16)
    bh = jnp.concatenate([bs.reshape(1, N_SENT), bc.reshape(1, N_CLAS)], axis=1)
    bh = jnp.pad(bh, ((0, 0), (0, HEAD_PAD - N_HEADS)))               # [1, 128] f32
    return (w1_bf,
            b1.reshape(1, HIDDEN),
            gamma.reshape(1, HIDDEN),
            beta.reshape(1, HIDDEN),
            wh, bh)


@functools.partial(jax.jit, static_argnames=("tb",))
def linear2head(x, w1_bf, b1, gamma, beta, wh, bh, *, tb=None):
    """Forward pass of Linear2HEAD on pre-packed params (see prepack_...)."""
    B, H = x.shape
    assert H == HIDDEN

    if tb is None:
        p_b = _round_up(B, 8)
        # Single grid step up to 1K rows on every generation: the ~1.2 MB bf16 W1
        # read dominates HBM traffic, so extra grid steps only add ~0.35 us/step
        # overhead on single-TC v5e/v6e and duplicate the W1 fetch across v7x's
        # two TensorCores.  Beyond ~1K rows, 512-row tiles (axis stays "parallel"
        # so megacore splits it once per-core x traffic outweighs the duplicate).
        tb = p_b if p_b <= 1024 else 512
    padded_b = _round_up(B, tb)
    grid = (padded_b // tb,)

    # Pad the batch only when it is not tile-aligned (no-op at the default sizes,
    # so no extra HBM pass over x).  Padded rows pass harmlessly through LN
    # (rsqrt(var+eps), no NaN) and are sliced off below.
    x_p = x if padded_b == B else jnp.pad(x, ((0, padded_b - B), (0, 0)))

    full2d = lambda shape: pl.BlockSpec(shape, lambda i: (0, 0))

    flops = 2 * padded_b * H * H + 2 * padded_b * H * HEAD_PAD
    bytes_accessed = (padded_b * H * x.dtype.itemsize   # x (f32, or bf16 if fused upstream)
                      + H * H * 2                       # W1 (bf16)
                      + H * HEAD_PAD * 2                # fused head weights (bf16)
                      + padded_b * HEAD_PAD * 4         # fused output (f32)
                      + (3 * H + HEAD_PAD) * 4)         # biases / LN params (f32)

    heads_out = pl.pallas_call(
        _linear2head_kernel,
        out_shape=jax.ShapeDtypeStruct((padded_b, HEAD_PAD), jnp.float32),
        grid_spec=pltpu.PrefetchScalarGridSpec(
            num_scalar_prefetch=0,
            grid=grid,
            in_specs=[
                pl.BlockSpec((tb, H), lambda i: (i, 0)),    # x tile over batch
                full2d((H, H)),                             # W1 (bf16, constant block)
                full2d((1, H)),                             # b1
                full2d((1, H)),                             # LN gamma
                full2d((1, H)),                             # LN beta
                full2d((H, HEAD_PAD)),                      # fused head weights (bf16)
                full2d((1, HEAD_PAD)),                      # fused head bias
            ],
            out_specs=pl.BlockSpec((tb, HEAD_PAD), lambda i: (i, 0)),
        ),
        compiler_params=pltpu.CompilerParams(
            dimension_semantics=("parallel",),
            # ~10 MiB double-buffered footprint at tb=1024: comfortably under the
            # 32 MiB scoped limit on v5e/v6e/v7x alike, so no generation-specific
            # tile shrinking and no need to single-buffer the constant blocks.
            vmem_limit_bytes=32 * 1024 * 1024),
        cost_estimate=pl.CostEstimate(
            flops=flops,
            transcendentals=padded_b * H,
            bytes_accessed=bytes_accessed),
    )(x_p, w1_bf, b1, gamma, beta, wh, bh)

    sent = heads_out[:B, :N_SENT]
    clas = heads_out[:B, N_SENT:N_HEADS]
    return sent, clas


def _reference(x, w1, b1, gamma, beta, ws, bs, wc, bc):
    h = x @ w1 + b1
    h = h * jax.nn.sigmoid(h)
    mean = jnp.mean(h, axis=-1, keepdims=True)
    var = jnp.mean((h - mean) ** 2, axis=-1, keepdims=True)
    hn = (h - mean) / jnp.sqrt(var + LN_EPS) * gamma + beta
    return hn @ ws + bs, hn @ wc + bc


if __name__ == "__main__":
    key = jax.random.PRNGKey(0)
    kx, k1, k2, k3, k4, k5, k6 = jax.random.split(key, 7)

    B, H = 8, HIDDEN
    # TODO(synk): the pretrained BertModel backbone (AutoModel.from_pretrained) has
    # no clean in-script Pallas equivalent; this random x stands in for its CLS
    # embedding BertModel(...).last_hidden_state[:, 0, :].
    x = jax.random.normal(kx, (B, H), dtype=jnp.float32)

    scale = 1.0 / jnp.sqrt(float(H))
    w1 = jax.random.normal(k1, (H, H), dtype=jnp.float32) * scale       # [in, out]
    b1 = jax.random.normal(k2, (1, H), dtype=jnp.float32) * 0.01
    gamma = jnp.ones((1, H), dtype=jnp.float32)
    beta = jnp.zeros((1, H), dtype=jnp.float32)
    ws = jax.random.normal(k3, (H, N_SENT), dtype=jnp.float32) * scale
    bs = jax.random.normal(k4, (1, N_SENT), dtype=jnp.float32) * 0.01
    wc = jax.random.normal(k5, (H, N_CLAS), dtype=jnp.float32) * scale
    bc = jax.random.normal(k6, (1, N_CLAS), dtype=jnp.float32) * 0.01

    # One-time, off-the-forward-path weight packing (bf16 cast, head fusion, pad).
    packed = jax.block_until_ready(
        prepack_linear2head_params(w1, b1, gamma, beta, ws, bs, wc, bc))

    sent, clas = linear2head(x, *packed)
    jax.block_until_ready((sent, clas))

    sent_ref, clas_ref = _reference(x, w1, b1, gamma, beta, ws, bs, wc, bc)
    assert sent.shape == (B, N_SENT) and clas.shape == (B, N_CLAS)
    # bf16 weights + approx EUP reciprocal -> looser tolerance vs. the pure-f32 reference.
    assert jnp.allclose(sent, sent_ref, atol=5e-2, rtol=5e-2), \
        float(jnp.max(jnp.abs(sent - sent_ref)))
    assert jnp.allclose(clas, clas_ref, atol=5e-2, rtol=5e-2), \
        float(jnp.max(jnp.abs(clas - clas_ref)))

    print("KERNEL_OK")
</pallas_src>

<mosaic_0001>
module attributes {stable_mosaic.version = 11 : i64} {
  func.func @_linear2head_kernel(%arg0: i32, %arg1: memref<8x768xf32, #tpu.memory_space<vmem>>, %arg2: memref<768x768xbf16, #tpu.memory_space<vmem>>, %arg3: memref<1x768xf32, #tpu.memory_space<vmem>>, %arg4: memref<1x768xf32, #tpu.memory_space<vmem>>, %arg5: memref<1x768xf32, #tpu.memory_space<vmem>>, %arg6: memref<768x128xbf16, #tpu.memory_space<vmem>>, %arg7: memref<1x128xf32, #tpu.memory_space<vmem>>, %arg8: memref<8x128xf32, #tpu.memory_space<vmem>>) attributes {dimension_semantics = [#tpu.dimension_semantics<parallel>], iteration_bounds = array<i64: 1>, scalar_prefetch = 0 : i64, scratch_operands = 0 : i64, tpu.core_type = #tpu.core_type<tc>, window_params = [{transform_indices = @transform_0, window_bounds = array<i64: 8, 768>}, {pipeline_mode = #tpu.pipeline_mode<synchronous>, transform_indices = @transform_1, window_bounds = array<i64: 768, 768>}, {pipeline_mode = #tpu.pipeline_mode<synchronous>, transform_indices = @transform_2, window_bounds = array<i64: 1, 768>}, {pipeline_mode = #tpu.pipeline_mode<synchronous>, transform_indices = @transform_3, window_bounds = array<i64: 1, 768>}, {pipeline_mode = #tpu.pipeline_mode<synchronous>, transform_indices = @transform_4, window_bounds = array<i64: 1, 768>}, {pipeline_mode = #tpu.pipeline_mode<synchronous>, transform_indices = @transform_5, window_bounds = array<i64: 768, 128>}, {pipeline_mode = #tpu.pipeline_mode<synchronous>, transform_indices = @transform_6, window_bounds = array<i64: 1, 128>}, {transform_indices = @transform_7, window_bounds = array<i64: 8, 128>}]} {
    %c0 = arith.constant 0 : index
    %c0_0 = arith.constant 0 : index
    %0 = vector.load %arg1[%c0, %c0_0] : memref<8x768xf32, #tpu.memory_space<vmem>>, vector<8x768xf32>
    %1 = arith.truncf %0 : vector<8x768xf32> to vector<8x768xbf16>
    %c0_1 = arith.constant 0 : index
    %c0_2 = arith.constant 0 : index
    %2 = vector.load %arg2[%c0_1, %c0_2] : memref<768x768xbf16, #tpu.memory_space<vmem>>, vector<768x768xbf16>
    %cst = arith.constant dense<0.000000e+00> : vector<8x768xf32>
    %3 = tpu.matmul %1, %2, %cst {dimension_numbers = #tpu.dot_dimension_numbers<[1], [0], [0], [1], [0, 0, 1, 1], [], []>} : vector<8x768xbf16>, vector<768x768xbf16>, vector<8x768xf32> -> vector<8x768xf32>
    %c0_3 = arith.constant 0 : index
    %c0_4 = arith.constant 0 : index
    %4 = vector.load %arg3[%c0_3, %c0_4] : memref<1x768xf32, #tpu.memory_space<vmem>>, vector<1x768xf32>
    %5 = vector.broadcast %4 : vector<1x768xf32> to vector<8x768xf32>
    %6 = arith.addf %3, %5 : vector<8x768xf32>
    %cst_5 = arith.constant 0.000000e+00 : f32
    %7 = vector.broadcast %cst_5 : f32 to vector<8x768xf32>
    %8 = arith.subf %7, %6 : vector<8x768xf32>
    %9 = math.exp %8 : vector<8x768xf32>
    %cst_6 = arith.constant 1.000000e+00 : f32
    %10 = vector.broadcast %cst_6 : f32 to vector<8x768xf32>
    %11 = arith.addf %10, %9 : vector<8x768xf32>
    %12 = tpu.reciprocal %11 {approx = true} : vector<8x768xf32> -> vector<8x768xf32>
    %13 = arith.mulf %6, %12 : vector<8x768xf32>
    %cst_7 = arith.constant dense<0.000000e+00> : vector<8xf32>
    %14 = vector.multi_reduction <add>, %13, %cst_7 [1] : vector<8x768xf32> to vector<8xf32>
    %15 = vector.shape_cast %14 : vector<8xf32> to vector<8x1xf32>
    %cst_8 = arith.constant 7.680000e+02 : f32
    %16 = vector.broadcast %cst_8 : f32 to vector<8x1xf32>
    %17 = arith.divf %15, %16 : vector<8x1xf32>
    %18 = vector.broadcast %17 : vector<8x1xf32> to vector<8x768xf32>
    %19 = arith.subf %13, %18 : vector<8x768xf32>
    %20 = arith.mulf %19, %19 : vector<8x768xf32>
    %cst_9 = arith.constant dense<0.000000e+00> : vector<8xf32>
    %21 = vector.multi_reduction <add>, %20, %cst_9 [1] : vector<8x768xf32> to vector<8xf32>
    %22 = vector.shape_cast %21 : vector<8xf32> to vector<8x1xf32>
    %cst_10 = arith.constant 7.680000e+02 : f32
    %23 = vector.broadcast %cst_10 : f32 to vector<8x1xf32>
    %24 = arith.divf %22, %23 : vector<8x1xf32>
    %cst_11 = arith.constant 9.99999974E-6 : f32
    %25 = vector.broadcast %cst_11 : f32 to vector<8x1xf32>
    %26 = arith.addf %24, %25 : vector<8x1xf32>
    %27 = math.rsqrt %26 : vector<8x1xf32>
    %28 = vector.broadcast %27 : vector<8x1xf32> to vector<8x768xf32>
    %29 = arith.mulf %19, %28 : vector<8x768xf32>
    %c0_12 = arith.constant 0 : index
    %c0_13 = arith.constant 0 : index
    %30 = vector.load %arg4[%c0_12, %c0_13] : memref<1x768xf32, #tpu.memory_space<vmem>>, vector<1x768xf32>
    %31 = vector.broadcast %30 : vector<1x768xf32> to vector<8x768xf32>
    %32 = arith.mulf %29, %31 : vector<8x768xf32>
    %c0_14 = arith.constant 0 : index
    %c0_15 = arith.constant 0 : index
    %33 = vector.load %arg5[%c0_14, %c0_15] : memref<1x768xf32, #tpu.memory_space<vmem>>, vector<1x768xf32>
    %34 = vector.broadcast %33 : vector<1x768xf32> to vector<8x768xf32>
    %35 = arith.addf %32, %34 : vector<8x768xf32>
    %36 = arith.truncf %35 : vector<8x768xf32> to vector<8x768xbf16>
    %c0_16 = arith.constant 0 : index
    %c0_17 = arith.constant 0 : index
    %37 = vector.load %arg6[%c0_16, %c0_17] : memref<768x128xbf16, #tpu.memory_space<vmem>>, vector<768x128xbf16>
    %cst_18 = arith.constant dense<0.000000e+00> : vector<8x128xf32>
    %38 = tpu.matmul %36, %37, %cst_18 {dimension_numbers = #tpu.dot_dimension_numbers<[1], [0], [0], [1], [0, 0, 1, 1], [], []>} : vector<8x768xbf16>, vector<768x128xbf16>, vector<8x128xf32> -> vector<8x128xf32>
    %c0_19 = arith.constant 0 : index
    %c0_20 = arith.constant 0 : index
    %39 = vector.load %arg7[%c0_19, %c0_20] : memref<1x128xf32, #tpu.memory_space<vmem>>, vector<1x128xf32>
    %40 = vector.broadcast %39 : vector<1x128xf32> to vector<8x128xf32>
    %41 = arith.addf %38, %40 : vector<8x128xf32>
    %c0_21 = arith.constant 0 : index
    %c0_22 = arith.constant 0 : index
    %42 = vector.load %arg8[%c0_21, %c0_22] : memref<8x128xf32, #tpu.memory_space<vmem>>, vector<8x128xf32>
    tpu.vector_store %arg8[%c0_21, %c0_22], %41 {strides = array<i32>} : memref<8x128xf32, #tpu.memory_space<vmem>>, vector<8x128xf32>,
    return
  }
  func.func @transform_0(%arg0: i32) -> (i32, i32) {
    %c0_i32 = arith.constant 0 : i32
    %c0_i32_0 = arith.constant 0 : i32
    return %arg0, %c0_i32 : i32, i32
  }
  func.func @transform_1(%arg0: i32) -> (i32, i32) {
    %c0_i32 = arith.constant 0 : i32
    %c0_i32_0 = arith.constant 0 : i32
    %c0_i32_1 = arith.constant 0 : i32
    return %c0_i32, %c0_i32_0 : i32, i32
  }
  func.func @transform_2(%arg0: i32) -> (i32, i32) {
    %c0_i32 = arith.constant 0 : i32
    %c0_i32_0 = arith.constant 0 : i32
    %c0_i32_1 = arith.constant 0 : i32
    return %c0_i32, %c0_i32_0 : i32, i32
  }
  func.func @transform_3(%arg0: i32) -> (i32, i32) {
    %c0_i32 = arith.constant 0 : i32
    %c0_i32_0 = arith.constant 0 : i32
    %c0_i32_1 = arith.constant 0 : i32
    return %c0_i32, %c0_i32_0 : i32, i32
  }
  func.func @transform_4(%arg0: i32) -> (i32, i32) {
    %c0_i32 = arith.constant 0 : i32
    %c0_i32_0 = arith.constant 0 : i32
    %c0_i32_1 = arith.constant 0 : i32
    return %c0_i32, %c0_i32_0 : i32, i32
  }
  func.func @transform_5(%arg0: i32) -> (i32, i32) {
    %c0_i32 = arith.constant 0 : i32
    %c0_i32_0 = arith.constant 0 : i32
    %c0_i32_1 = arith.constant 0 : i32
    return %c0_i32, %c0_i32_0 : i32, i32
  }
  func.func @transform_6(%arg0: i32) -> (i32, i32) {
    %c0_i32 = arith.constant 0 : i32
    %c0_i32_0 = arith.constant 0 : i32
    %c0_i32_1 = arith.constant 0 : i32
    return %c0_i32, %c0_i32_0 : i32, i32
  }
  func.func @transform_7(%arg0: i32) -> (i32, i32) {
    %c0_i32 = arith.constant 0 : i32
    %c0_i32_0 = arith.constant 0 : i32
    return %arg0, %c0_i32 : i32, i32
  }
}

</mosaic_0001>

<llo_original>
// kernel: linear2head.1
$region0: #{linear2head.1}
  #allocation0 [shape = 'u32[]', space=smem, size = 0x4, offset = 0x4, fixed_abs, tag = 'smem constant byte address 0x4 - core index']
  #allocation1 [shape = 'u32[144,128]{1,0:T(1,128)}', space=vmem, size = 0x12000, scoped, tag = 'internal scratch']
  %s0 = inlined_call_operand.hbm [shape: f32[8,768], index: 0, kind: input, shape index: {}]
  %s1 = inlined_call_operand.hbm [shape: bf16[768,768], index: 1, kind: input, shape index: {}]
  %s2 = inlined_call_operand.hbm [shape: f32[1,768], index: 2, kind: input, shape index: {}]
  %s3 = inlined_call_operand.hbm [shape: f32[1,768], index: 3, kind: input, shape index: {}]
  %s4 = inlined_call_operand.hbm [shape: f32[1,768], index: 4, kind: input, shape index: {}]
  %s5 = inlined_call_operand.hbm [shape: bf16[768,128], index: 5, kind: input, shape index: {}]
  %s6 = inlined_call_operand.hbm [shape: f32[1,128], index: 6, kind: input, shape index: {}]
  %s7 = inlined_call_operand.vmem [shape: f32[8,128], index: 7, kind: output, shape index: {}]
  %s8 = sld [smem:[#allocation0]]
  $region66: #{linear2head.1} parent=0
    _
  %s10 = ssub.s32 1, %s8
  %s11 = scalar_select 0, %s10, %s8
  $region1: #{linear2head.1} parent=0
    #allocation2 [shape = 'u8[24576]{0}', space=vmem, size = 0x6000, scoped, tag = 'input window, operand 0, single buffered']
    #allocation3 [shape = 's32[1]{0}', space=sflag, size = 0x4, scoped, tag = 'scoped memory for linear2head.1']
    #allocation4 [shape = 'u8[1179648]{0}', space=vmem, size = 0x120000, scoped, tag = 'input window, operand 1, single buffered']
    #allocation5 [shape = 's32[1]{0}', space=sflag, size = 0x4, scoped, tag = 'scoped memory for linear2head.1']
    #allocation6 [shape = 'u8[3072]{0}', space=vmem, size = 0xc00, scoped, tag = 'input window, operand 2, single buffered']
    #allocation7 [shape = 'u8[3072]{0}', space=vmem, size = 0xc00, scoped, tag = 'input window, operand 3, single buffered']
    #allocation8 [shape = 's32[1]{0}', space=sflag, size = 0x4, scoped, tag = 'scoped memory for linear2head.1']
    #allocation9 [shape = 'u8[3072]{0}', space=vmem, size = 0xc00, scoped, tag = 'input window, operand 4, single buffered']
    #allocation10 [shape = 'u8[196608]{0}', space=vmem, size = 0x30000, scoped, tag = 'input window, operand 5, single buffered']
    #allocation11 [shape = 's32[1]{0}', space=sflag, size = 0x4, scoped, tag = 'scoped memory for linear2head.1']
    #allocation12 [shape = 'u8[512]{0}', space=vmem, size = 0x400, scoped, tag = 'input window, operand 6, single buffered']
    %12 = vsyncpa [#allocation3], 0
    %13 = vsyncpa [#allocation5], 0
    %14 = vsyncpa [#allocation8], 0
    %15 = vsyncpa [#allocation11], 0
    // Predicated region
    $region2: #{linear2head.1} parent=1 // pred_check
      _
    $region3: #{linear2head.1} parent=1 // pred_check_branch
      %17 = sbr.rel (0) target = $region5
    $region4: #{linear2head.1} parent=1 // pred_region
      %s19 = ssub.s32 768, 768
      %20 = vsyncadd [#allocation3], %s19
      %s22 = sshll.u32 [#allocation2], 4
      %s23 = int_to_ptr.vmem [resolvable:$true] %s22
      %25 = dma.hbm_to_vmem [thread:$0]  %s0, 768, %s23, [#allocation3]
    $region5: #{linear2head.1} parent=1 // pred_fallthru
      _
    // Predicated region
    $region6: #{linear2head.1} parent=1 // pred_check
      _
    $region7: #{linear2head.1} parent=1 // pred_check_branch
      %27 = sbr.rel (0) target = $region9
    $region8: #{linear2head.1} parent=1 // pred_region
      %s29 = ssub.s32 36864, 36864
      %30 = vsyncadd [#allocation5], %s29
      %s31 = sshll.u32 [#allocation4], 4
      %s32 = int_to_ptr.vmem [resolvable:$true] %s31
      %37 = dma.hbm_to_vmem [thread:$0]  %s1, 36864, %s32, [#allocation5], 384, 384, 24
    $region9: #{linear2head.1} parent=1 // pred_fallthru
      _
    // Predicated region
    $region10: #{linear2head.1} parent=1 // pred_check
      _
    $region11: #{linear2head.1} parent=1 // pred_check_branch
      %39 = sbr.rel (0) target = $region13
    $region12: #{linear2head.1} parent=1 // pred_region
      %s41 = ssub.s32 96, 96
      %42 = vsyncadd [#allocation5], %s41
      %s44 = sshll.u32 [#allocation6], 4
      %s45 = int_to_ptr.vmem [resolvable:$true] %s44
      %47 = dma.hbm_to_vmem [thread:$0]  %s2, 96, %s45, [#allocation5]
    $region13: #{linear2head.1} parent=1 // pred_fallthru
      _
    // Predicated region
    $region14: #{linear2head.1} parent=1 // pred_check
      _
    $region15: #{linear2head.1} parent=1 // pred_check_branch
      %49 = sbr.rel (0) target = $region17
    $region16: #{linear2head.1} parent=1 // pred_region
      %s51 = ssub.s32 96, 96
      %52 = vsyncadd [#allocation8], %s51
      %s54 = sshll.u32 [#allocation7], 4
      %s55 = int_to_ptr.vmem [resolvable:$true] %s54
      %57 = dma.hbm_to_vmem [thread:$0]  %s3, 96, %s55, [#allocation8]
    $region17: #{linear2head.1} parent=1 // pred_fallthru
      _
    // Predicated region
    $region18: #{linear2head.1} parent=1 // pred_check
      _
    $region19: #{linear2head.1} parent=1 // pred_check_branch
      %59 = sbr.rel (0) target = $region21
    $region20: #{linear2head.1} parent=1 // pred_region
      %s61 = ssub.s32 96, 96
      %62 = vsyncadd [#allocation8], %s61
      %s64 = sshll.u32 [#allocation9], 4
      %s65 = int_to_ptr.vmem [resolvable:$true] %s64
      %67 = dma.hbm_to_vmem [thread:$0]  %s4, 96, %s65, [#allocation8]
    $region21: #{linear2head.1} parent=1 // pred_fallthru
      _
    // Predicated region
    $region22: #{linear2head.1} parent=1 // pred_check
      _
    $region23: #{linear2head.1} parent=1 // pred_check_branch
      %69 = sbr.rel (0) target = $region25
    $region24: #{linear2head.1} parent=1 // pred_region
      %s71 = ssub.s32 6144, 6144
      %72 = vsyncadd [#allocation11], %s71
      %s73 = sshll.u32 [#allocation10], 4
      %s74 = int_to_ptr.vmem [resolvable:$true] %s73
      %79 = dma.hbm_to_vmem [thread:$0]  %s5, 6144, %s74, [#allocation11], 64, 64, 4
    $region25: #{linear2head.1} parent=1 // pred_fallthru
      _
    // Predicated region
    $region26: #{linear2head.1} parent=1 // pred_check
      _
    $region27: #{linear2head.1} parent=1 // pred_check_branch
      %81 = sbr.rel (0) target = $region29
    $region28: #{linear2head.1} parent=1 // pred_region
      %s83 = ssub.s32 16, 16
      %84 = vsyncadd [#allocation11], %s83
      %s86 = sshll.u32 [#allocation12], 4
      %s87 = int_to_ptr.vmem [resolvable:$true] %s86
      %89 = dma.hbm_to_vmem [thread:$0]  %s6, 16, %s87, [#allocation11]
    $region29: #{linear2head.1} parent=1 // pred_fallthru
      _
    // Predicated region
    $region30: #{linear2head.1} parent=1 // pred_check
      _
    $region31: #{linear2head.1} parent=1 // pred_check_branch
      %91 = sbr.rel (0) target = $region33
    $region32: #{linear2head.1} parent=1 // pred_region
      %92 = dma.done [#allocation3], 768
    $region33: #{linear2head.1} parent=1 // pred_fallthru
      _
    // Predicated region
    $region34: #{linear2head.1} parent=1 // pred_check
      _
    $region35: #{linear2head.1} parent=1 // pred_check_branch
      %94 = sbr.rel (0) target = $region37
    $region36: #{linear2head.1} parent=1 // pred_region
      %95 = dma.done [#allocation5], 36864
    $region37: #{linear2head.1} parent=1 // pred_fallthru
      _
    // Predicated region
    $region38: #{linear2head.1} parent=1 // pred_check
      _
    $region39: #{linear2head.1} parent=1 // pred_check_branch
      %97 = sbr.rel (0) target = $region41
    $region40: #{linear2head.1} parent=1 // pred_region
      %98 = dma.done [#allocation5], 96
    $region41: #{linear2head.1} parent=1 // pred_fallthru
      _
    // Predicated region
    $region42: #{linear2head.1} parent=1 // pred_check
      _
    $region43: #{linear2head.1} parent=1 // pred_check_branch
      %100 = sbr.rel (0) target = $region45
    $region44: #{linear2head.1} parent=1 // pred_region
      %101 = dma.done [#allocation8], 96
    $region45: #{linear2head.1} parent=1 // pred_fallthru
      _
    // Predicated region
    $region46: #{linear2head.1} parent=1 // pred_check
      _
    $region47: #{linear2head.1} parent=1 // pred_check_branch
      %103 = sbr.rel (0) target = $region49
    $region48: #{linear2head.1} parent=1 // pred_region
      %104 = dma.done [#allocation8], 96
    $region49: #{linear2head.1} parent=1 // pred_fallthru
      _
    // Predicated region
    $region50: #{linear2head.1} parent=1 // pred_check
      _
    $region51: #{linear2head.1} parent=1 // pred_check_branch
      %106 = sbr.rel (0) target = $region53
    $region52: #{linear2head.1} parent=1 // pred_region
      %107 = dma.done [#allocation11], 6144
    $region53: #{linear2head.1} parent=1 // pred_fallthru
      _
    // Predicated region
    $region54: #{linear2head.1} parent=1 // pred_check
      _
    $region55: #{linear2head.1} parent=1 // pred_check_branch
      %109 = sbr.rel (0) target = $region57
    $region56: #{linear2head.1} parent=1 // pred_region
      %110 = dma.done [#allocation11], 16
    $region57: #{linear2head.1} parent=1 // pred_fallthru
      _
    %v112 = vld [vmem:[#allocation2] sm:$0xff]
    %v113 = vld [vmem:[#allocation2 + $0x8] sm:$0xff]
    %v114 = vld [vmem:[#allocation2 + $0x10] sm:$0xff]
    %v115 = vld [vmem:[#allocation2 + $0x18] sm:$0xff]
    %v116 = vld [vmem:[#allocation2 + $0x20] sm:$0xff]
    %v117 = vld [vmem:[#allocation2 + $0x28] sm:$0xff]
    %v118 = vpack.c.bf16 %v112, %v112
    %v119 = vpack.c.bf16 %v113, %v113
    %v120 = vpack.c.bf16 %v114, %v114
    %v121 = vpack.c.bf16 %v115, %v115
    %v122 = vpack.c.bf16 %v116, %v116
    %v123 = vpack.c.bf16 %v117, %v117
    %v124 = vld [vmem:[#allocation4] sm:$0xff]
    %v125 = vld [vmem:[#allocation4 + $0x8] sm:$0xff]
    %v126 = vld [vmem:[#allocation4 + $0x10] sm:$0xff]
    %v127 = vld [vmem:[#allocation4 + $0x18] sm:$0xff]
    %v128 = vld [vmem:[#allocation4 + $0x20] sm:$0xff]
    %v129 = vld [vmem:[#allocation4 + $0x28] sm:$0xff]
    %v130 = vld [vmem:[#allocation4 + $0x30] sm:$0xff]
    %v131 = vld [vmem:[#allocation4 + $0x38] sm:$0xff]
    %v132 = vld [vmem:[#allocation4 + $0x40] sm:$0xff]
    %v133 = vld [vmem:[#allocation4 + $0x48] sm:$0xff]
    %v134 = vld [vmem:[#allocation4 + $0x50] sm:$0xff]
    %v135 = vld [vmem:[#allocation4 + $0x58] sm:$0xff]
    %v136 = vld [vmem:[#allocation4 + $0x60] sm:$0xff]
    %v137 = vld [vmem:[#allocation4 + $0x68] sm:$0xff]
    %v138 = vld [vmem:[#allocation4 + $0x70] sm:$0xff]
    %v139 = vld [vmem:[#allocation4 + $0x78] sm:$0xff]
    %v140 = vld [vmem:[#allocation4 + $0x80] sm:$0xff]
    %v141 = vld [vmem:[#allocation4 + $0x88] sm:$0xff]
    %v142 = vld [vmem:[#allocation4 + $0x90] sm:$0xff]
    %v143 = vld [vmem:[#allocation4 + $0x98] sm:$0xff]
    %v144 = vld [vmem:[#allocation4 + $0xa0] sm:$0xff]
    %v145 = vld [vmem:[#allocation4 + $0xa8] sm:$0xff]
    %v146 = vld [vmem:[#allocation4 + $0xb0] sm:$0xff]
    %v147 = vld [vmem:[#allocation4 + $0xb8] sm:$0xff]
    %v148 = vld [vmem:[#allocation4 + $0xc0] sm:$0xff]
    %v149 = vld [vmem:[#allocation4 + $0xc8] sm:$0xff]
    %v150 = vld [vmem:[#allocation4 + $0xd0] sm:$0xff]
    %v151 = vld [vmem:[#allocation4 + $0xd8] sm:$0xff]
    %v152 = vld [vmem:[#allocation4 + $0xe0] sm:$0xff]
    %v153 = vld [vmem:[#allocation4 + $0xe8] sm:$0xff]
    %v154 = vld [vmem:[#allocation4 + $0xf0] sm:$0xff]
    %v155 = vld [vmem:[#allocation4 + $0xf8] sm:$0xff]
    %v156 = vld [vmem:[#allocation4 + $0x100] sm:$0xff]
    %v157 = vld [vmem:[#allocation4 + $0x108] sm:$0xff]
    %v158 = vld [vmem:[#allocation4 + $0x110] sm:$0xff]
    %v159 = vld [vmem:[#allocation4 + $0x118] sm:$0xff]
    %v160 = vld [vmem:[#allocation4 + $0x120] sm:$0xff]
    %v161 = vld [vmem:[#allocation4 + $0x128] sm:$0xff]
    %v162 = vld [vmem:[#allocation4 + $0x130] sm:$0xff]
    %v163 = vld [vmem:[#allocation4 + $0x138] sm:$0xff]
    %v164 = vld [vmem:[#allocation4 + $0x140] sm:$0xff]
    %v165 = vld [vmem:[#allocation4 + $0x148] sm:$0xff]
    %v166 = vld [vmem:[#allocation4 + $0x150] sm:$0xff]
    %v167 = vld [vmem:[#allocation4 + $0x158] sm:$0xff]
    %v168 = vld [vmem:[#allocation4 + $0x160] sm:$0xff]
    %v169 = vld [vmem:[#allocation4 + $0x168] sm:$0xff]
    %v170 = vld [vmem:[#allocation4 + $0x170] sm:$0xff]
    %v171 = vld [vmem:[#allocation4 + $0x178] sm:$0xff]
    %v172 = vld [vmem:[#allocation4 + $0x180] sm:$0xff]
    %v173 = vld [vmem:[#allocation4 + $0x188] sm:$0xff]
    %v174 = vld [vmem:[#allocation4 + $0x190] sm:$0xff]
    %v175 = vld [vmem:[#allocation4 + $0x198] sm:$0xff]
    %v176 = vld [vmem:[#allocation4 + $0x1a0] sm:$0xff]
    %v177 = vld [vmem:[#allocation4 + $0x1a8] sm:$0xff]
    %v178 = vld [vmem:[#allocation4 + $0x1b0] sm:$0xff]
    %v179 = vld [vmem:[#allocation4 + $0x1b8] sm:$0xff]
    %v180 = vld [vmem:[#allocation4 + $0x1c0] sm:$0xff]
    %v181 = vld [vmem:[#allocation4 + $0x1c8] sm:$0xff]
    %v182 = vld [vmem:[#allocation4 + $0x1d0] sm:$0xff]
    %v183 = vld [vmem:[#allocation4 + $0x1d8] sm:$0xff]
    %v184 = vld [vmem:[#allocation4 + $0x1e0] sm:$0xff]
    %v185 = vld [vmem:[#allocation4 + $0x1e8] sm:$0xff]
    %v186 = vld [vmem:[#allocation4 + $0x1f0] sm:$0xff]
    %v187 = vld [vmem:[#allocation4 + $0x1f8] sm:$0xff]
    %v188 = vld [vmem:[#allocation4 + $0x200] sm:$0xff]
    %v189 = vld [vmem:[#allocation4 + $0x208] sm:$0xff]
    %v190 = vld [vmem:[#allocation4 + $0x210] sm:$0xff]
    %v191 = vld [vmem:[#allocation4 + $0x218] sm:$0xff]
    %v192 = vld [vmem:[#allocation4 + $0x220] sm:$0xff]
    %v193 = vld [vmem:[#allocation4 + $0x228] sm:$0xff]
    %v194 = vld [vmem:[#allocation4 + $0x230] sm:$0xff]
    %v195 = vld [vmem:[#allocation4 + $0x238] sm:$0xff]
    %v196 = vld [vmem:[#allocation4 + $0x240] sm:$0xff]
    %v197 = vld [vmem:[#allocation4 + $0x248] sm:$0xff]
    %v198 = vld [vmem:[#allocation4 + $0x250] sm:$0xff]
    %v199 = vld [vmem:[#allocation4 + $0x258] sm:$0xff]
    %v200 = vld [vmem:[#allocation4 + $0x260] sm:$0xff]
    %v201 = vld [vmem:[#allocation4 + $0x268] sm:$0xff]
    %v202 = vld [vmem:[#allocation4 + $0x270] sm:$0xff]
    %v203 = vld [vmem:[#allocation4 + $0x278] sm:$0xff]
    %v204 = vld [vmem:[#allocation4 + $0x280] sm:$0xff]
    %v205 = vld [vmem:[#allocation4 + $0x288] sm:$0xff]
    %v206 = vld [vmem:[#allocation4 + $0x290] sm:$0xff]
    %v207 = vld [vmem:[#allocation4 + $0x298] sm:$0xff]
    %v208 = vld [vmem:[#allocation4 + $0x2a0] sm:$0xff]
    %v209 = vld [vmem:[#allocation4 + $0x2a8] sm:$0xff]
    %v210 = vld [vmem:[#allocation4 + $0x2b0] sm:$0xff]
    %v211 = vld [vmem:[#allocation4 + $0x2b8] sm:$0xff]
    %v212 = vld [vmem:[#allocation4 + $0x2c0] sm:$0xff]
    %v213 = vld [vmem:[#allocation4 + $0x2c8] sm:$0xff]
    %v214 = vld [vmem:[#allocation4 + $0x2d0] sm:$0xff]
    %v215 = vld [vmem:[#allocation4 + $0x2d8] sm:$0xff]
    %v216 = vld [vmem:[#allocation4 + $0x2e0] sm:$0xff]
    %v217 = vld [vmem:[#allocation4 + $0x2e8] sm:$0xff]
    %v218 = vld [vmem:[#allocation4 + $0x2f0] sm:$0xff]
    %v219 = vld [vmem:[#allocation4 + $0x2f8] sm:$0xff]
    %v220 = vld [vmem:[#allocation4 + $0x300] sm:$0xff]
    %v221 = vld [vmem:[#allocation4 + $0x308] sm:$0xff]
    %v222 = vld [vmem:[#allocation4 + $0x310] sm:$0xff]
    %v223 = vld [vmem:[#allocation4 + $0x318] sm:$0xff]
    %v224 = vld [vmem:[#allocation4 + $0x320] sm:$0xff]
    %v225 = vld [vmem:[#allocation4 + $0x328] sm:$0xff]
    %v226 = vld [vmem:[#allocation4 + $0x330] sm:$0xff]
    %v227 = vld [vmem:[#allocation4 + $0x338] sm:$0xff]
    %v228 = vld [vmem:[#allocation4 + $0x340] sm:$0xff]
    %v229 = vld [vmem:[#allocation4 + $0x348] sm:$0xff]
    %v230 = vld [vmem:[#allocation4 + $0x350] sm:$0xff]
    %v231 = vld [vmem:[#allocation4 + $0x358] sm:$0xff]
    %v232 = vld [vmem:[#allocation4 + $0x360] sm:$0xff]
    %v233 = vld [vmem:[#allocation4 + $0x368] sm:$0xff]
    %v234 = vld [vmem:[#allocation4 + $0x370] sm:$0xff]
    %v235 = vld [vmem:[#allocation4 + $0x378] sm:$0xff]
    %v236 = vld [vmem:[#allocation4 + $0x380] sm:$0xff]
    %v237 = vld [vmem:[#allocation4 + $0x388] sm:$0xff]
    %v238 = vld [vmem:[#allocation4 + $0x390] sm:$0xff]
    %v239 = vld [vmem:[#allocation4 + $0x398] sm:$0xff]
    %v240 = vld [vmem:[#allocation4 + $0x3a0] sm:$0xff]
    %v241 = vld [vmem:[#allocation4 + $0x3a8] sm:$0xff]
    %v242 = vld [vmem:[#allocation4 + $0x3b0] sm:$0xff]
    %v243 = vld [vmem:[#allocation4 + $0x3b8] sm:$0xff]
    %v244 = vld [vmem:[#allocation4 + $0x3c0] sm:$0xff]
    %v245 = vld [vmem:[#allocation4 + $0x3c8] sm:$0xff]
    %v246 = vld [vmem:[#allocation4 + $0x3d0] sm:$0xff]
    %v247 = vld [vmem:[#allocation4 + $0x3d8] sm:$0xff]
    %v248 = vld [vmem:[#allocation4 + $0x3e0] sm:$0xff]
    %v249 = vld [vmem:[#allocation4 + $0x3e8] sm:$0xff]
    %v250 = vld [vmem:[#allocation4 + $0x3f0] sm:$0xff]
    %v251 = vld [vmem:[#allocation4 + $0x3f8] sm:$0xff]
    %v252 = vld [vmem:[#allocation4 + $0x400] sm:$0xff]
    %v253 = vld [vmem:[#allocation4 + $0x408] sm:$0xff]
    %v254 = vld [vmem:[#allocation4 + $0x410] sm:$0xff]
    %v255 = vld [vmem:[#allocation4 + $0x418] sm:$0xff]
    %v256 = vld [vmem:[#allocation4 + $0x420] sm:$0xff]
    %v257 = vld [vmem:[#allocation4 + $0x428] sm:$0xff]
    %v258 = vld [vmem:[#allocation4 + $0x430] sm:$0xff]
    %v259 = vld [vmem:[#allocation4 + $0x438] sm:$0xff]
    %v260 = vld [vmem:[#allocation4 + $0x440] sm:$0xff]
    %v261 = vld [vmem:[#allocation4 + $0x448] sm:$0xff]
    %v262 = vld [vmem:[#allocation4 + $0x450] sm:$0xff]
    %v263 = vld [vmem:[#allocation4 + $0x458] sm:$0xff]
    %v264 = vld [vmem:[#allocation4 + $0x460] sm:$0xff]
    %v265 = vld [vmem:[#allocation4 + $0x468] sm:$0xff]
    %v266 = vld [vmem:[#allocation4 + $0x470] sm:$0xff]
    %v267 = vld [vmem:[#allocation4 + $0x478] sm:$0xff]
    %v268 = vld [vmem:[#allocation4 + $0x480] sm:$0xff]
    %v269 = vld [vmem:[#allocation4 + $0x488] sm:$0xff]
    %v270 = vld [vmem:[#allocation4 + $0x490] sm:$0xff]
    %v271 = vld [vmem:[#allocation4 + $0x498] sm:$0xff]
    %v272 = vld [vmem:[#allocation4 + $0x4a0] sm:$0xff]
    %v273 = vld [vmem:[#allocation4 + $0x4a8] sm:$0xff]
    %v274 = vld [vmem:[#allocation4 + $0x4b0] sm:$0xff]
    %v275 = vld [vmem:[#allocation4 + $0x4b8] sm:$0xff]
    %v276 = vld [vmem:[#allocation4 + $0x4c0] sm:$0xff]
    %v277 = vld [vmem:[#allocation4 + $0x4c8] sm:$0xff]
    %v278 = vld [vmem:[#allocation4 + $0x4d0] sm:$0xff]
    %v279 = vld [vmem:[#allocation4 + $0x4d8] sm:$0xff]
    %v280 = vld [vmem:[#allocation4 + $0x4e0] sm:$0xff]
    %v281 = vld [vmem:[#allocation4 + $0x4e8] sm:$0xff]
    %v282 = vld [vmem:[#allocation4 + $0x4f0] sm:$0xff]
    %v283 = vld [vmem:[#allocation4 + $0x4f8] sm:$0xff]
    %v284 = vld [vmem:[#allocation4 + $0x500] sm:$0xff]
    %v285 = vld [vmem:[#allocation4 + $0x508] sm:$0xff]
    %v286 = vld [vmem:[#allocation4 + $0x510] sm:$0xff]
    %v287 = vld [vmem:[#allocation4 + $0x518] sm:$0xff]
    %v288 = vld [vmem:[#allocation4 + $0x520] sm:$0xff]
    %v289 = vld [vmem:[#allocation4 + $0x528] sm:$0xff]
    %v290 = vld [vmem:[#allocation4 + $0x530] sm:$0xff]
    %v291 = vld [vmem:[#allocation4 + $0x538] sm:$0xff]
    %v292 = vld [vmem:[#allocation4 + $0x540] sm:$0xff]
    %v293 = vld [vmem:[#allocation4 + $0x548] sm:$0xff]
    %v294 = vld [vmem:[#allocation4 + $0x550] sm:$0xff]
    %v295 = vld [vmem:[#allocation4 + $0x558] sm:$0xff]
    %v296 = vld [vmem:[#allocation4 + $0x560] sm:$0xff]
    %v297 = vld [vmem:[#allocation4 + $0x568] sm:$0xff]
    %v298 = vld [vmem:[#allocation4 + $0x570] sm:$0xff]
    %v299 = vld [vmem:[#allocation4 + $0x578] sm:$0xff]
    %v300 = vld [vmem:[#allocation4 + $0x580] sm:$0xff]
    %v301 = vld [vmem:[#allocation4 + $0x588] sm:$0xff]
    %v302 = vld [vmem:[#allocation4 + $0x590] sm:$0xff]
    %v303 = vld [vmem:[#allocation4 + $0x598] sm:$0xff]
    %v304 = vld [vmem:[#allocation4 + $0x5a0] sm:$0xff]
    %v305 = vld [vmem:[#allocation4 + $0x5a8] sm:$0xff]
    %v306 = vld [vmem:[#allocation4 + $0x5b0] sm:$0xff]
    %v307 = vld [vmem:[#allocation4 + $0x5b8] sm:$0xff]
    %v308 = vld [vmem:[#allocation4 + $0x5c0] sm:$0xff]
    %v309 = vld [vmem:[#allocation4 + $0x5c8] sm:$0xff]
    %v310 = vld [vmem:[#allocation4 + $0x5d0] sm:$0xff]
    %v311 = vld [vmem:[#allocation4 + $0x5d8] sm:$0xff]
    %v312 = vld [vmem:[#allocation4 + $0x5e0] sm:$0xff]
    %v313 = vld [vmem:[#allocation4 + $0x5e8] sm:$0xff]
    %v314 = vld [vmem:[#allocation4 + $0x5f0] sm:$0xff]
    %v315 = vld [vmem:[#allocation4 + $0x5f8] sm:$0xff]
    %v316 = vld [vmem:[#allocation4 + $0x600] sm:$0xff]
    %v317 = vld [vmem:[#allocation4 + $0x608] sm:$0xff]
    %v318 = vld [vmem:[#allocation4 + $0x610] sm:$0xff]
    %v319 = vld [vmem:[#allocation4 + $0x618] sm:$0xff]
    %v320 = vld [vmem:[#allocation4 + $0x620] sm:$0xff]
    %v321 = vld [vmem:[#allocation4 + $0x628] sm:$0xff]
    %v322 = vld [vmem:[#allocation4 + $0x630] sm:$0xff]
    %v323 = vld [vmem:[#allocation4 + $0x638] sm:$0xff]
    %v324 = vld [vmem:[#allocation4 + $0x640] sm:$0xff]
    %v325 = vld [vmem:[#allocation4 + $0x648] sm:$0xff]
    %v326 = vld [vmem:[#allocation4 + $0x650] sm:$0xff]
    %v327 = vld [vmem:[#allocation4 + $0x658] sm:$0xff]
    %v328 = vld [vmem:[#allocation4 + $0x660] sm:$0xff]
    %v329 = vld [vmem:[#allocation4 + $0x668] sm:$0xff]
    %v330 = vld [vmem:[#allocation4 + $0x670] sm:$0xff]
    %v331 = vld [vmem:[#allocation4 + $0x678] sm:$0xff]
    %v332 = vld [vmem:[#allocation4 + $0x680] sm:$0xff]
    %v333 = vld [vmem:[#allocation4 + $0x688] sm:$0xff]
    %v334 = vld [vmem:[#allocation4 + $0x690] sm:$0xff]
    %v335 = vld [vmem:[#allocation4 + $0x698] sm:$0xff]
    %v336 = vld [vmem:[#allocation4 + $0x6a0] sm:$0xff]
    %v337 = vld [vmem:[#allocation4 + $0x6a8] sm:$0xff]
    %v338 = vld [vmem:[#allocation4 + $0x6b0] sm:$0xff]
    %v339 = vld [vmem:[#allocation4 + $0x6b8] sm:$0xff]
    %v340 = vld [vmem:[#allocation4 + $0x6c0] sm:$0xff]
    %v341 = vld [vmem:[#allocation4 + $0x6c8] sm:$0xff]
    %v342 = vld [vmem:[#allocation4 + $0x6d0] sm:$0xff]
    %v343 = vld [vmem:[#allocation4 + $0x6d8] sm:$0xff]
    %v344 = vld [vmem:[#allocation4 + $0x6e0] sm:$0xff]
    %v345 = vld [vmem:[#allocation4 + $0x6e8] sm:$0xff]
    %v346 = vld [vmem:[#allocation4 + $0x6f0] sm:$0xff]
    %v347 = vld [vmem:[#allocation4 + $0x6f8] sm:$0xff]
    %v348 = vld [vmem:[#allocation4 + $0x700] sm:$0xff]
    %v349 = vld [vmem:[#allocation4 + $0x708] sm:$0xff]
    %v350 = vld [vmem:[#allocation4 + $0x710] sm:$0xff]
    %v351 = vld [vmem:[#allocation4 + $0x718] sm:$0xff]
    %v352 = vld [vmem:[#allocation4 + $0x720] sm:$0xff]
    %v353 = vld [vmem:[#allocation4 + $0x728] sm:$0xff]
    %v354 = vld [vmem:[#allocation4 + $0x730] sm:$0xff]
    %v355 = vld [vmem:[#allocation4 + $0x738] sm:$0xff]
    %v356 = vld [vmem:[#allocation4 + $0x740] sm:$0xff]
    %v357 = vld [vmem:[#allocation4 + $0x748] sm:$0xff]
    %v358 = vld [vmem:[#allocation4 + $0x750] sm:$0xff]
    %v359 = vld [vmem:[#allocation4 + $0x758] sm:$0xff]
    %v360 = vld [vmem:[#allocation4 + $0x760] sm:$0xff]
    %v361 = vld [vmem:[#allocation4 + $0x768] sm:$0xff]
    %v362 = vld [vmem:[#allocation4 + $0x770] sm:$0xff]
    %v363 = vld [vmem:[#allocation4 + $0x778] sm:$0xff]
    %v364 = vld [vmem:[#allocation4 + $0x780] sm:$0xff]
    %v365 = vld [vmem:[#allocation4 + $0x788] sm:$0xff]
    %v366 = vld [vmem:[#allocation4 + $0x790] sm:$0xff]
    %v367 = vld [vmem:[#allocation4 + $0x798] sm:$0xff]
    %v368 = vld [vmem:[#allocation4 + $0x7a0] sm:$0xff]
    %v369 = vld [vmem:[#allocation4 + $0x7a8] sm:$0xff]
    %v370 = vld [vmem:[#allocation4 + $0x7b0] sm:$0xff]
    %v371 = vld [vmem:[#allocation4 + $0x7b8] sm:$0xff]
    %v372 = vld [vmem:[#allocation4 + $0x7c0] sm:$0xff]
    %v373 = vld [vmem:[#allocation4 + $0x7c8] sm:$0xff]
    %v374 = vld [vmem:[#allocation4 + $0x7d0] sm:$0xff]
    %v375 = vld [vmem:[#allocation4 + $0x7d8] sm:$0xff]
    %v376 = vld [vmem:[#allocation4 + $0x7e0] sm:$0xff]
    %v377 = vld [vmem:[#allocation4 + $0x7e8] sm:$0xff]
    %v378 = vld [vmem:[#allocation4 + $0x7f0] sm:$0xff]
    %v379 = vld [vmem:[#allocation4 + $0x7f8] sm:$0xff]
    %v380 = vld [vmem:[#allocation4 + $0x800] sm:$0xff]
    %v381 = vld [vmem:[#allocation4 + $0x808] sm:$0xff]
    %v382 = vld [vmem:[#allocation4 + $0x810] sm:$0xff]
    %v383 = vld [vmem:[#allocation4 + $0x818] sm:$0xff]
    %v384 = vld [vmem:[#allocation4 + $0x820] sm:$0xff]
    %v385 = vld [vmem:[#allocation4 + $0x828] sm:$0xff]
    %v386 = vld [vmem:[#allocation4 + $0x830] sm:$0xff]
    %v387 = vld [vmem:[#allocation4 + $0x838] sm:$0xff]
    %v388 = vld [vmem:[#allocation4 + $0x840] sm:$0xff]
    %v389 = vld [vmem:[#allocation4 + $0x848] sm:$0xff]
    %v390 = vld [vmem:[#allocation4 + $0x850] sm:$0xff]
    %v391 = vld [vmem:[#allocation4 + $0x858] sm:$0xff]
    %v392 = vld [vmem:[#allocation4 + $0x860] sm:$0xff]
    %v393 = vld [vmem:[#allocation4 + $0x868] sm:$0xff]
    %v394 = vld [vmem:[#allocation4 + $0x870] sm:$0xff]
    %v395 = vld [vmem:[#allocation4 + $0x878] sm:$0xff]
    %v396 = vld [vmem:[#allocation4 + $0x880] sm:$0xff]
    %v397 = vld [vmem:[#allocation4 + $0x888] sm:$0xff]
    %v398 = vld [vmem:[#allocation4 + $0x890] sm:$0xff]
    %v399 = vld [vmem:[#allocation4 + $0x898] sm:$0xff]
    %v400 = vld [vmem:[#allocation4 + $0x8a0] sm:$0xff]
    %v401 = vld [vmem:[#allocation4 + $0x8a8] sm:$0xff]
    %v402 = vld [vmem:[#allocation4 + $0x8b0] sm:$0xff]
    %v403 = vld [vmem:[#allocation4 + $0x8b8] sm:$0xff]
    %v404 = vld [vmem:[#allocation4 + $0x8c0] sm:$0xff]
    %v405 = vld [vmem:[#allocation4 + $0x8c8] sm:$0xff]
    %v406 = vld [vmem:[#allocation4 + $0x8d0] sm:$0xff]
    %v407 = vld [vmem:[#allocation4 + $0x8d8] sm:$0xff]
    %v408 = vld [vmem:[#allocation4 + $0x8e0] sm:$0xff]
    %v409 = vld [vmem:[#allocation4 + $0x8e8] sm:$0xff]
    %v410 = vld [vmem:[#allocation4 + $0x8f0] sm:$0xff]
    %v411 = vld [vmem:[#allocation4 + $0x8f8] sm:$0xff]
    %v412 = vld [vmem:[#allocation6] sm:$0x3f]
    %v414 = vlaneseq
    %v415 = vshrl.u32 %v414, 7
    %v416 = vsub.s32 0, %v415
    %v417 = vrot.slane %v412, %v416
    %v418 = vlaneseq
    %v419 = vshrl.u32 %v418, 7
    %v420 = vsub.s32 1, %v419
    %v421 = vrot.slane %v412, %v420
    %v422 = vlaneseq
    %v423 = vshrl.u32 %v422, 7
    %v424 = vsub.s32 2, %v423
    %v425 = vrot.slane %v412, %v424
    %v426 = vlaneseq
    %v427 = vshrl.u32 %v426, 7
    %v428 = vsub.s32 3, %v427
    %v429 = vrot.slane %v412, %v428
    %v430 = vlaneseq
    %v431 = vshrl.u32 %v430, 7
    %v432 = vsub.s32 4, %v431
    %v433 = vrot.slane %v412, %v432
    %v434 = vlaneseq
    %v435 = vshrl.u32 %v434, 7
    %v436 = vsub.s32 5, %v435
    %v437 = vrot.slane %v412, %v436
    %v732 = vunpack.c.l.b16 %v124
    %v733 = vunpack.c.h.b16 %v124
    %v734 = vunpack.c.l.b16 %v125
    %v735 = vunpack.c.h.b16 %v125
    %v736 = vunpack.c.l.b16 %v126
    %v737 = vunpack.c.h.b16 %v126
    %v738 = vunpack.c.l.b16 %v127
    %v739 = vunpack.c.h.b16 %v127
    %v740 = vunpack.c.l.b16 %v128
    %v741 = vunpack.c.h.b16 %v128
    %v742 = vunpack.c.l.b16 %v129
    %v743 = vunpack.c.h.b16 %v129
    %v744 = vunpack.c.l.b16 %v130
    %v745 = vunpack.c.h.b16 %v130
    %v746 = vunpack.c.l.b16 %v131
    %v747 = vunpack.c.h.b16 %v131
    %v748 = vunpack.c.l.b16 %v132
    %v749 = vunpack.c.h.b16 %v132
    %v750 = vunpack.c.l.b16 %v133
    %v751 = vunpack.c.h.b16 %v133
    %v752 = vunpack.c.l.b16 %v134
    %v753 = vunpack.c.h.b16 %v134
    %v754 = vunpack.c.l.b16 %v135
    %v755 = vunpack.c.h.b16 %v135
    %v756 = vunpack.c.l.b16 %v136
    %v757 = vunpack.c.h.b16 %v136
    %v758 = vunpack.c.l.b16 %v137
    %v759 = vunpack.c.h.b16 %v137
    %v760 = vunpack.c.l.b16 %v138
    %v761 = vunpack.c.h.b16 %v138
    %v762 = vunpack.c.l.b16 %v139
    %v763 = vunpack.c.h.b16 %v139
    %v764 = vunpack.c.l.b16 %v140
    %v765 = vunpack.c.h.b16 %v140
    %v766 = vunpack.c.l.b16 %v141
    %v767 = vunpack.c.h.b16 %v141
    %v768 = vunpack.c.l.b16 %v142
    %v769 = vunpack.c.h.b16 %v142
    %v770 = vunpack.c.l.b16 %v143
    %v771 = vunpack.c.h.b16 %v143
    %v772 = vunpack.c.l.b16 %v144
    %v773 = vunpack.c.h.b16 %v144
    %v774 = vunpack.c.l.b16 %v145
    %v775 = vunpack.c.h.b16 %v145
    %v776 = vunpack.c.l.b16 %v146
    %v777 = vunpack.c.h.b16 %v146
    %v778 = vunpack.c.l.b16 %v147
    %v779 = vunpack.c.h.b16 %v147
    %v780 = vunpack.c.l.b16 %v148
    %v781 = vunpack.c.h.b16 %v148
    %v782 = vunpack.c.l.b16 %v149
    %v783 = vunpack.c.h.b16 %v149
    %v784 = vunpack.c.l.b16 %v150
    %v785 = vunpack.c.h.b16 %v150
    %v786 = vunpack.c.l.b16 %v151
    %v787 = vunpack.c.h.b16 %v151
    %v788 = vunpack.c.l.b16 %v152
    %v789 = vunpack.c.h.b16 %v152
    %v790 = vunpack.c.l.b16 %v153
    %v791 = vunpack.c.h.b16 %v153
    %v792 = vunpack.c.l.b16 %v154
    %v793 = vunpack.c.h.b16 %v154
    %v794 = vunpack.c.l.b16 %v155
    %v795 = vunpack.c.h.b16 %v155
    %v796 = vunpack.c.l.b16 %v156
    %v797 = vunpack.c.h.b16 %v156
    %v798 = vunpack.c.l.b16 %v157
    %v799 = vunpack.c.h.b16 %v157
    %v800 = vunpack.c.l.b16 %v158
    %v801 = vunpack.c.h.b16 %v158
    %v802 = vunpack.c.l.b16 %v159
    %v803 = vunpack.c.h.b16 %v159
    %v804 = vunpack.c.l.b16 %v160
    %v805 = vunpack.c.h.b16 %v160
    %v806 = vunpack.c.l.b16 %v161
    %v807 = vunpack.c.h.b16 %v161
    %v808 = vunpack.c.l.b16 %v162
    %v809 = vunpack.c.h.b16 %v162
    %v810 = vunpack.c.l.b16 %v163
    %v811 = vunpack.c.h.b16 %v163
    %v812 = vunpack.c.l.b16 %v164
    %v813 = vunpack.c.h.b16 %v164
    %v814 = vunpack.c.l.b16 %v165
    %v815 = vunpack.c.h.b16 %v165
    %v816 = vunpack.c.l.b16 %v166
    %v817 = vunpack.c.h.b16 %v166
    %v818 = vunpack.c.l.b16 %v167
    %v819 = vunpack.c.h.b16 %v167
    %v820 = vunpack.c.l.b16 %v168
    %v821 = vunpack.c.h.b16 %v168
    %v822 = vunpack.c.l.b16 %v169
    %v823 = vunpack.c.h.b16 %v169
    %v824 = vunpack.c.l.b16 %v170
    %v825 = vunpack.c.h.b16 %v170
    %v826 = vunpack.c.l.b16 %v171
    %v827 = vunpack.c.h.b16 %v171
    %v828 = vunpack.c.l.b16 %v172
    %v829 = vunpack.c.h.b16 %v172
    %v830 = vunpack.c.l.b16 %v173
    %v831 = vunpack.c.h.b16 %v173
    %v832 = vunpack.c.l.b16 %v174
    %v833 = vunpack.c.h.b16 %v174
    %v834 = vunpack.c.l.b16 %v175
    %v835 = vunpack.c.h.b16 %v175
    %v836 = vunpack.c.l.b16 %v176
    %v837 = vunpack.c.h.b16 %v176
    %v838 = vunpack.c.l.b16 %v177
    %v839 = vunpack.c.h.b16 %v177
    %v840 = vunpack.c.l.b16 %v178
    %v841 = vunpack.c.h.b16 %v178
    %v842 = vunpack.c.l.b16 %v179
    %v843 = vunpack.c.h.b16 %v179
    %v844 = vunpack.c.l.b16 %v180
    %v845 = vunpack.c.h.b16 %v180
    %v846 = vunpack.c.l.b16 %v181
    %v847 = vunpack.c.h.b16 %v181
    %v848 = vunpack.c.l.b16 %v182
    %v849 = vunpack.c.h.b16 %v182
    %v850 = vunpack.c.l.b16 %v183
    %v851 = vunpack.c.h.b16 %v183
    %v852 = vunpack.c.l.b16 %v184
    %v853 = vunpack.c.h.b16 %v184
    %v854 = vunpack.c.l.b16 %v185
    %v855 = vunpack.c.h.b16 %v185
    %v856 = vunpack.c.l.b16 %v186
    %v857 = vunpack.c.h.b16 %v186
    %v858 = vunpack.c.l.b16 %v187
    %v859 = vunpack.c.h.b16 %v187
    %v860 = vunpack.c.l.b16 %v188
    %v861 = vunpack.c.h.b16 %v188
    %v862 = vunpack.c.l.b16 %v189
    %v863 = vunpack.c.h.b16 %v189
    %v864 = vunpack.c.l.b16 %v190
    %v865 = vunpack.c.h.b16 %v190
    %v866 = vunpack.c.l.b16 %v191
    %v867 = vunpack.c.h.b16 %v191
    %v868 = vunpack.c.l.b16 %v192
    %v869 = vunpack.c.h.b16 %v192
    %v870 = vunpack.c.l.b16 %v193
    %v871 = vunpack.c.h.b16 %v193
    %v872 = vunpack.c.l.b16 %v194
    %v873 = vunpack.c.h.b16 %v194
    %v874 = vunpack.c.l.b16 %v195
    %v875 = vunpack.c.h.b16 %v195
    %v876 = vunpack.c.l.b16 %v196
    %v877 = vunpack.c.h.b16 %v196
    %v878 = vunpack.c.l.b16 %v197
    %v879 = vunpack.c.h.b16 %v197
    %v880 = vunpack.c.l.b16 %v198
    %v881 = vunpack.c.h.b16 %v198
    %v882 = vunpack.c.l.b16 %v199
    %v883 = vunpack.c.h.b16 %v199
    %v884 = vunpack.c.l.b16 %v200
    %v885 = vunpack.c.h.b16 %v200
    %v886 = vunpack.c.l.b16 %v201
    %v887 = vunpack.c.h.b16 %v201
    %v888 = vunpack.c.l.b16 %v202
    %v889 = vunpack.c.h.b16 %v202
    %v890 = vunpack.c.l.b16 %v203
    %v891 = vunpack.c.h.b16 %v203
    %v892 = vunpack.c.l.b16 %v204
    %v893 = vunpack.c.h.b16 %v204
    %v894 = vunpack.c.l.b16 %v205
    %v895 = vunpack.c.h.b16 %v205
    %v896 = vunpack.c.l.b16 %v206
    %v897 = vunpack.c.h.b16 %v206
    %v898 = vunpack.c.l.b16 %v207
    %v899 = vunpack.c.h.b16 %v207
    %v900 = vunpack.c.l.b16 %v208
    %v901 = vunpack.c.h.b16 %v208
    %v902 = vunpack.c.l.b16 %v209
    %v903 = vunpack.c.h.b16 %v209
    %v904 = vunpack.c.l.b16 %v210
    %v905 = vunpack.c.h.b16 %v210
    %v906 = vunpack.c.l.b16 %v211
    %v907 = vunpack.c.h.b16 %v211
    %v908 = vunpack.c.l.b16 %v212
    %v909 = vunpack.c.h.b16 %v212
    %v910 = vunpack.c.l.b16 %v213
    %v911 = vunpack.c.h.b16 %v213
    %v912 = vunpack.c.l.b16 %v214
    %v913 = vunpack.c.h.b16 %v214
    %v914 = vunpack.c.l.b16 %v215
    %v915 = vunpack.c.h.b16 %v215
    %v916 = vunpack.c.l.b16 %v216
    %v917 = vunpack.c.h.b16 %v216
    %v918 = vunpack.c.l.b16 %v217
    %v919 = vunpack.c.h.b16 %v217
    %v920 = vunpack.c.l.b16 %v218
    %v921 = vunpack.c.h.b16 %v218
    %v922 = vunpack.c.l.b16 %v219
    %v923 = vunpack.c.h.b16 %v219
    %v924 = vunpack.c.l.b16 %v220
    %v925 = vunpack.c.h.b16 %v220
    %v926 = vunpack.c.l.b16 %v221
    %v927 = vunpack.c.h.b16 %v221
    %v928 = vunpack.c.l.b16 %v222
    %v929 = vunpack.c.h.b16 %v222
    %v930 = vunpack.c.l.b16 %v223
    %v931 = vunpack.c.h.b16 %v223
    %v932 = vunpack.c.l.b16 %v224
    %v933 = vunpack.c.h.b16 %v224
    %v934 = vunpack.c.l.b16 %v225
    %v935 = vunpack.c.h.b16 %v225
    %v936 = vunpack.c.l.b16 %v226
    %v937 = vunpack.c.h.b16 %v226
    %v938 = vunpack.c.l.b16 %v227
    %v939 = vunpack.c.h.b16 %v227
    %v940 = vunpack.c.l.b16 %v228
    %v941 = vunpack.c.h.b16 %v228
    %v942 = vunpack.c.l.b16 %v229
    %v943 = vunpack.c.h.b16 %v229
    %v944 = vunpack.c.l.b16 %v230
    %v945 = vunpack.c.h.b16 %v230
    %v946 = vunpack.c.l.b16 %v231
    %v947 = vunpack.c.h.b16 %v231
    %v948 = vunpack.c.l.b16 %v232
    %v949 = vunpack.c.h.b16 %v232
    %v950 = vunpack.c.l.b16 %v233
    %v951 = vunpack.c.h.b16 %v233
    %v952 = vunpack.c.l.b16 %v234
    %v953 = vunpack.c.h.b16 %v234
    %v954 = vunpack.c.l.b16 %v235
    %v955 = vunpack.c.h.b16 %v235
    %v956 = vunpack.c.l.b16 %v236
    %v957 = vunpack.c.h.b16 %v236
    %v958 = vunpack.c.l.b16 %v237
    %v959 = vunpack.c.h.b16 %v237
    %v960 = vunpack.c.l.b16 %v238
    %v961 = vunpack.c.h.b16 %v238
    %v962 = vunpack.c.l.b16 %v239
    %v963 = vunpack.c.h.b16 %v239
    %v964 = vunpack.c.l.b16 %v240
    %v965 = vunpack.c.h.b16 %v240
    %v966 = vunpack.c.l.b16 %v241
    %v967 = vunpack.c.h.b16 %v241
    %v968 = vunpack.c.l.b16 %v242
    %v969 = vunpack.c.h.b16 %v242
    %v970 = vunpack.c.l.b16 %v243
    %v971 = vunpack.c.h.b16 %v243
    %v972 = vunpack.c.l.b16 %v244
    %v973 = vunpack.c.h.b16 %v244
    %v974 = vunpack.c.l.b16 %v245
    %v975 = vunpack.c.h.b16 %v245
    %v976 = vunpack.c.l.b16 %v246
    %v977 = vunpack.c.h.b16 %v246
    %v978 = vunpack.c.l.b16 %v247
    %v979 = vunpack.c.h.b16 %v247
    %v980 = vunpack.c.l.b16 %v248
    %v981 = vunpack.c.h.b16 %v248
    %v982 = vunpack.c.l.b16 %v249
    %v983 = vunpack.c.h.b16 %v249
    %v984 = vunpack.c.l.b16 %v250
    %v985 = vunpack.c.h.b16 %v250
    %v986 = vunpack.c.l.b16 %v251
    %v987 = vunpack.c.h.b16 %v251
    %v988 = vunpack.c.l.b16 %v252
    %v989 = vunpack.c.h.b16 %v252
    %v990 = vunpack.c.l.b16 %v253
    %v991 = vunpack.c.h.b16 %v253
    %v992 = vunpack.c.l.b16 %v254
    %v993 = vunpack.c.h.b16 %v254
    %v994 = vunpack.c.l.b16 %v255
    %v995 = vunpack.c.h.b16 %v255
    %v996 = vunpack.c.l.b16 %v256
    %v997 = vunpack.c.h.b16 %v256
    %v998 = vunpack.c.l.b16 %v257
    %v999 = vunpack.c.h.b16 %v257
    %v1000 = vunpack.c.l.b16 %v258
    %v1001 = vunpack.c.h.b16 %v258
    %v1002 = vunpack.c.l.b16 %v259
    %v1003 = vunpack.c.h.b16 %v259
    %v1004 = vunpack.c.l.b16 %v260
    %v1005 = vunpack.c.h.b16 %v260
    %v1006 = vunpack.c.l.b16 %v261
    %v1007 = vunpack.c.h.b16 %v261
    %v1008 = vunpack.c.l.b16 %v262
    %v1009 = vunpack.c.h.b16 %v262
    %v1010 = vunpack.c.l.b16 %v263
    %v1011 = vunpack.c.h.b16 %v263
    %v1012 = vunpack.c.l.b16 %v264
    %v1013 = vunpack.c.h.b16 %v264
    %v1014 = vunpack.c.l.b16 %v265
    %v1015 = vunpack.c.h.b16 %v265
    %v1016 = vunpack.c.l.b16 %v266
    %v1017 = vunpack.c.h.b16 %v266
    %v1018 = vunpack.c.l.b16 %v267
    %v1019 = vunpack.c.h.b16 %v267
    %v1020 = vunpack.c.l.b16 %v268
    %v1021 = vunpack.c.h.b16 %v268
    %v1022 = vunpack.c.l.b16 %v269
    %v1023 = vunpack.c.h.b16 %v269
    %v1024 = vunpack.c.l.b16 %v270
    %v1025 = vunpack.c.h.b16 %v270
    %v1026 = vunpack.c.l.b16 %v271
    %v1027 = vunpack.c.h.b16 %v271
    %v1028 = vunpack.c.l.b16 %v272
    %v1029 = vunpack.c.h.b16 %v272
    %v1030 = vunpack.c.l.b16 %v273
    %v1031 = vunpack.c.h.b16 %v273
    %v1032 = vunpack.c.l.b16 %v274
    %v1033 = vunpack.c.h.b16 %v274
    %v1034 = vunpack.c.l.b16 %v275
    %v1035 = vunpack.c.h.b16 %v275
    %v1036 = vunpack.c.l.b16 %v276
    %v1037 = vunpack.c.h.b16 %v276
    %v1038 = vunpack.c.l.b16 %v277
    %v1039 = vunpack.c.h.b16 %v277
    %v1040 = vunpack.c.l.b16 %v278
    %v1041 = vunpack.c.h.b16 %v278
    %v1042 = vunpack.c.l.b16 %v279
    %v1043 = vunpack.c.h.b16 %v279
    %v1044 = vunpack.c.l.b16 %v280
    %v1045 = vunpack.c.h.b16 %v280
    %v1046 = vunpack.c.l.b16 %v281
    %v1047 = vunpack.c.h.b16 %v281
    %v1048 = vunpack.c.l.b16 %v282
    %v1049 = vunpack.c.h.b16 %v282
    %v1050 = vunpack.c.l.b16 %v283
    %v1051 = vunpack.c.h.b16 %v283
    %v1052 = vunpack.c.l.b16 %v284
    %v1053 = vunpack.c.h.b16 %v284
    %v1054 = vunpack.c.l.b16 %v285
    %v1055 = vunpack.c.h.b16 %v285
    %v1056 = vunpack.c.l.b16 %v286
    %v1057 = vunpack.c.h.b16 %v286
    %v1058 = vunpack.c.l.b16 %v287
    %v1059 = vunpack.c.h.b16 %v287
    %v1060 = vunpack.c.l.b16 %v288
    %v1061 = vunpack.c.h.b16 %v288
    %v1062 = vunpack.c.l.b16 %v289
    %v1063 = vunpack.c.h.b16 %v289
    %v1064 = vunpack.c.l.b16 %v290
    %v1065 = vunpack.c.h.b16 %v290
    %v1066 = vunpack.c.l.b16 %v291
    %v1067 = vunpack.c.h.b16 %v291
    %v1068 = vunpack.c.l.b16 %v292
    %v1069 = vunpack.c.h.b16 %v292
    %v1070 = vunpack.c.l.b16 %v293
    %v1071 = vunpack.c.h.b16 %v293
    %v1072 = vunpack.c.l.b16 %v294
    %v1073 = vunpack.c.h.b16 %v294
    %v1074 = vunpack.c.l.b16 %v295
    %v1075 = vunpack.c.h.b16 %v295
    %v1076 = vunpack.c.l.b16 %v296
    %v1077 = vunpack.c.h.b16 %v296
    %v1078 = vunpack.c.l.b16 %v297
    %v1079 = vunpack.c.h.b16 %v297
    %v1080 = vunpack.c.l.b16 %v298
    %v1081 = vunpack.c.h.b16 %v298
    %v1082 = vunpack.c.l.b16 %v299
    %v1083 = vunpack.c.h.b16 %v299
    %v1084 = vunpack.c.l.b16 %v300
    %v1085 = vunpack.c.h.b16 %v300
    %v1086 = vunpack.c.l.b16 %v301
    %v1087 = vunpack.c.h.b16 %v301
    %v1088 = vunpack.c.l.b16 %v302
    %v1089 = vunpack.c.h.b16 %v302
    %v1090 = vunpack.c.l.b16 %v303
    %v1091 = vunpack.c.h.b16 %v303
    %v1092 = vunpack.c.l.b16 %v304
    %v1093 = vunpack.c.h.b16 %v304
    %v1094 = vunpack.c.l.b16 %v305
    %v1095 = vunpack.c.h.b16 %v305
    %v1096 = vunpack.c.l.b16 %v306
    %v1097 = vunpack.c.h.b16 %v306
    %v1098 = vunpack.c.l.b16 %v307
    %v1099 = vunpack.c.h.b16 %v307
    %v1100 = vunpack.c.l.b16 %v308
    %v1101 = vunpack.c.h.b16 %v308
    %v1102 = vunpack.c.l.b16 %v309
    %v1103 = vunpack.c.h.b16 %v309
    %v1104 = vunpack.c.l.b16 %v310
    %v1105 = vunpack.c.h.b16 %v310
    %v1106 = vunpack.c.l.b16 %v311
    %v1107 = vunpack.c.h.b16 %v311
    %v1108 = vunpack.c.l.b16 %v312
    %v1109 = vunpack.c.h.b16 %v312
    %v1110 = vunpack.c.l.b16 %v313
    %v1111 = vunpack.c.h.b16 %v313
    %v1112 = vunpack.c.l.b16 %v314
    %v1113 = vunpack.c.h.b16 %v314
    %v1114 = vunpack.c.l.b16 %v315
    %v1115 = vunpack.c.h.b16 %v315
    %v1116 = vunpack.c.l.b16 %v316
    %v1117 = vunpack.c.h.b16 %v316
    %v1118 = vunpack.c.l.b16 %v317
    %v1119 = vunpack.c.h.b16 %v317
    %v1120 = vunpack.c.l.b16 %v318
    %v1121 = vunpack.c.h.b16 %v318
    %v1122 = vunpack.c.l.b16 %v319
    %v1123 = vunpack.c.h.b16 %v319
    %v1124 = vunpack.c.l.b16 %v320
    %v1125 = vunpack.c.h.b16 %v320
    %v1126 = vunpack.c.l.b16 %v321
    %v1127 = vunpack.c.h.b16 %v321
    %v1128 = vunpack.c.l.b16 %v322
    %v1129 = vunpack.c.h.b16 %v322
    %v1130 = vunpack.c.l.b16 %v323
    %v1131 = vunpack.c.h.b16 %v323
    %v1132 = vunpack.c.l.b16 %v324
    %v1133 = vunpack.c.h.b16 %v324
    %v1134 = vunpack.c.l.b16 %v325
    %v1135 = vunpack.c.h.b16 %v325
    %v1136 = vunpack.c.l.b16 %v326
    %v1137 = vunpack.c.h.b16 %v326
    %v1138 = vunpack.c.l.b16 %v327
    %v1139 = vunpack.c.h.b16 %v327
    %v1140 = vunpack.c.l.b16 %v328
    %v1141 = vunpack.c.h.b16 %v328
    %v1142 = vunpack.c.l.b16 %v329
    %v1143 = vunpack.c.h.b16 %v329
    %v1144 = vunpack.c.l.b16 %v330
    %v1145 = vunpack.c.h.b16 %v330
    %v1146 = vunpack.c.l.b16 %v331
    %v1147 = vunpack.c.h.b16 %v331
    %v1148 = vunpack.c.l.b16 %v332
    %v1149 = vunpack.c.h.b16 %v332
    %v1150 = vunpack.c.l.b16 %v333
    %v1151 = vunpack.c.h.b16 %v333
    %v1152 = vunpack.c.l.b16 %v334
    %v1153 = vunpack.c.h.b16 %v334
    %v1154 = vunpack.c.l.b16 %v335
    %v1155 = vunpack.c.h.b16 %v335
    %v1156 = vunpack.c.l.b16 %v336
    %v1157 = vunpack.c.h.b16 %v336
    %v1158 = vunpack.c.l.b16 %v337
    %v1159 = vunpack.c.h.b16 %v337
    %v1160 = vunpack.c.l.b16 %v338
    %v1161 = vunpack.c.h.b16 %v338
    %v1162 = vunpack.c.l.b16 %v339
    %v1163 = vunpack.c.h.b16 %v339
    %v1164 = vunpack.c.l.b16 %v340
    %v1165 = vunpack.c.h.b16 %v340
    %v1166 = vunpack.c.l.b16 %v341
    %v1167 = vunpack.c.h.b16 %v341
    %v1168 = vunpack.c.l.b16 %v342
    %v1169 = vunpack.c.h.b16 %v342
    %v1170 = vunpack.c.l.b16 %v343
    %v1171 = vunpack.c.h.b16 %v343
    %v1172 = vunpack.c.l.b16 %v344
    %v1173 = vunpack.c.h.b16 %v344
    %v1174 = vunpack.c.l.b16 %v345
    %v1175 = vunpack.c.h.b16 %v345
    %v1176 = vunpack.c.l.b16 %v346
    %v1177 = vunpack.c.h.b16 %v346
    %v1178 = vunpack.c.l.b16 %v347
    %v1179 = vunpack.c.h.b16 %v347
    %v1180 = vunpack.c.l.b16 %v348
    %v1181 = vunpack.c.h.b16 %v348
    %v1182 = vunpack.c.l.b16 %v349
    %v1183 = vunpack.c.h.b16 %v349
    %v1184 = vunpack.c.l.b16 %v350
    %v1185 = vunpack.c.h.b16 %v350
    %v1186 = vunpack.c.l.b16 %v351
    %v1187 = vunpack.c.h.b16 %v351
    %v1188 = vunpack.c.l.b16 %v352
    %v1189 = vunpack.c.h.b16 %v352
    %v1190 = vunpack.c.l.b16 %v353
    %v1191 = vunpack.c.h.b16 %v353
    %v1192 = vunpack.c.l.b16 %v354
    %v1193 = vunpack.c.h.b16 %v354
    %v1194 = vunpack.c.l.b16 %v355
    %v1195 = vunpack.c.h.b16 %v355
    %v1196 = vunpack.c.l.b16 %v356
    %v1197 = vunpack.c.h.b16 %v356
    %v1198 = vunpack.c.l.b16 %v357
    %v1199 = vunpack.c.h.b16 %v357
    %v1200 = vunpack.c.l.b16 %v358
    %v1201 = vunpack.c.h.b16 %v358
    %v1202 = vunpack.c.l.b16 %v359
    %v1203 = vunpack.c.h.b16 %v359
    %v1204 = vunpack.c.l.b16 %v360
    %v1205 = vunpack.c.h.b16 %v360
    %v1206 = vunpack.c.l.b16 %v361
    %v1207 = vunpack.c.h.b16 %v361
    %v1208 = vunpack.c.l.b16 %v362
    %v1209 = vunpack.c.h.b16 %v362
    %v1210 = vunpack.c.l.b16 %v363
    %v1211 = vunpack.c.h.b16 %v363
    %v1212 = vunpack.c.l.b16 %v364
    %v1213 = vunpack.c.h.b16 %v364
    %v1214 = vunpack.c.l.b16 %v365
    %v1215 = vunpack.c.h.b16 %v365
    %v1216 = vunpack.c.l.b16 %v366
    %v1217 = vunpack.c.h.b16 %v366
    %v1218 = vunpack.c.l.b16 %v367
    %v1219 = vunpack.c.h.b16 %v367
    %v1220 = vunpack.c.l.b16 %v368
    %v1221 = vunpack.c.h.b16 %v368
    %v1222 = vunpack.c.l.b16 %v369
    %v1223 = vunpack.c.h.b16 %v369
    %v1224 = vunpack.c.l.b16 %v370
    %v1225 = vunpack.c.h.b16 %v370
    %v1226 = vunpack.c.l.b16 %v371
    %v1227 = vunpack.c.h.b16 %v371
    %v1228 = vunpack.c.l.b16 %v372
    %v1229 = vunpack.c.h.b16 %v372
    %v1230 = vunpack.c.l.b16 %v373
    %v1231 = vunpack.c.h.b16 %v373
    %v1232 = vunpack.c.l.b16 %v374
    %v1233 = vunpack.c.h.b16 %v374
    %v1234 = vunpack.c.l.b16 %v375
    %v1235 = vunpack.c.h.b16 %v375
    %v1236 = vunpack.c.l.b16 %v376
    %v1237 = vunpack.c.h.b16 %v376
    %v1238 = vunpack.c.l.b16 %v377
    %v1239 = vunpack.c.h.b16 %v377
    %v1240 = vunpack.c.l.b16 %v378
    %v1241 = vunpack.c.h.b16 %v378
    %v1242 = vunpack.c.l.b16 %v379
    %v1243 = vunpack.c.h.b16 %v379
    %v1244 = vunpack.c.l.b16 %v380
    %v1245 = vunpack.c.h.b16 %v380
    %v1246 = vunpack.c.l.b16 %v381
    %v1247 = vunpack.c.h.b16 %v381
    %v1248 = vunpack.c.l.b16 %v382
    %v1249 = vunpack.c.h.b16 %v382
    %v1250 = vunpack.c.l.b16 %v383
    %v1251 = vunpack.c.h.b16 %v383
    %v1252 = vunpack.c.l.b16 %v384
    %v1253 = vunpack.c.h.b16 %v384
    %v1254 = vunpack.c.l.b16 %v385
    %v1255 = vunpack.c.h.b16 %v385
    %v1256 = vunpack.c.l.b16 %v386
    %v1257 = vunpack.c.h.b16 %v386
    %v1258 = vunpack.c.l.b16 %v387
    %v1259 = vunpack.c.h.b16 %v387
    %v1260 = vunpack.c.l.b16 %v388
    %v1261 = vunpack.c.h.b16 %v388
    %v1262 = vunpack.c.l.b16 %v389
    %v1263 = vunpack.c.h.b16 %v389
    %v1264 = vunpack.c.l.b16 %v390
    %v1265 = vunpack.c.h.b16 %v390
    %v1266 = vunpack.c.l.b16 %v391
    %v1267 = vunpack.c.h.b16 %v391
    %v1268 = vunpack.c.l.b16 %v392
    %v1269 = vunpack.c.h.b16 %v392
    %v1270 = vunpack.c.l.b16 %v393
    %v1271 = vunpack.c.h.b16 %v393
    %v1272 = vunpack.c.l.b16 %v394
    %v1273 = vunpack.c.h.b16 %v394
    %v1274 = vunpack.c.l.b16 %v395
    %v1275 = vunpack.c.h.b16 %v395
    %v1276 = vunpack.c.l.b16 %v396
    %v1277 = vunpack.c.h.b16 %v396
    %v1278 = vunpack.c.l.b16 %v397
    %v1279 = vunpack.c.h.b16 %v397
    %v1280 = vunpack.c.l.b16 %v398
    %v1281 = vunpack.c.h.b16 %v398
    %v1282 = vunpack.c.l.b16 %v399
    %v1283 = vunpack.c.h.b16 %v399
    %v1284 = vunpack.c.l.b16 %v400
    %v1285 = vunpack.c.h.b16 %v400
    %v1286 = vunpack.c.l.b16 %v401
    %v1287 = vunpack.c.h.b16 %v401
    %v1288 = vunpack.c.l.b16 %v402
    %v1289 = vunpack.c.h.b16 %v402
    %v1290 = vunpack.c.l.b16 %v403
    %v1291 = vunpack.c.h.b16 %v403
    %v1292 = vunpack.c.l.b16 %v404
    %v1293 = vunpack.c.h.b16 %v404
    %v1294 = vunpack.c.l.b16 %v405
    %v1295 = vunpack.c.h.b16 %v405
    %v1296 = vunpack.c.l.b16 %v406
    %v1297 = vunpack.c.h.b16 %v406
    %v1298 = vunpack.c.l.b16 %v407
    %v1299 = vunpack.c.h.b16 %v407
    %v1300 = vunpack.c.l.b16 %v408
    %v1301 = vunpack.c.h.b16 %v408
    %v1302 = vunpack.c.l.b16 %v409
    %v1303 = vunpack.c.h.b16 %v409
    %v1304 = vunpack.c.l.b16 %v410
    %v1305 = vunpack.c.h.b16 %v410
    %v1306 = vunpack.c.l.b16 %v411
    %v1307 = vunpack.c.h.b16 %v411
    %v1308 = vpack.c.b16 %v738, %v732
    %v1309 = vpack.c.b16 %v739, %v733
    %v1310 = vpack.c.b16 %v740, %v734
    %v1311 = vpack.c.b16 %v741, %v735
    %v1312 = vpack.c.b16 %v742, %v736
    %v1313 = vpack.c.b16 %v743, %v737
    %v1314 = vpack.c.b16 %v750, %v744
    %v1315 = vpack.c.b16 %v751, %v745
    %v1316 = vpack.c.b16 %v752, %v746
    %v1317 = vpack.c.b16 %v753, %v747
    %v1318 = vpack.c.b16 %v754, %v748
    %v1319 = vpack.c.b16 %v755, %v749
    %v1320 = vpack.c.b16 %v762, %v756
    %v1321 = vpack.c.b16 %v763, %v757
    %v1322 = vpack.c.b16 %v764, %v758
    %v1323 = vpack.c.b16 %v765, %v759
    %v1324 = vpack.c.b16 %v766, %v760
    %v1325 = vpack.c.b16 %v767, %v761
    %v1326 = vpack.c.b16 %v774, %v768
    %v1327 = vpack.c.b16 %v775, %v769
    %v1328 = vpack.c.b16 %v776, %v770
    %v1329 = vpack.c.b16 %v777, %v771
    %v1330 = vpack.c.b16 %v778, %v772
    %v1331 = vpack.c.b16 %v779, %v773
    %v1332 = vpack.c.b16 %v786, %v780
    %v1333 = vpack.c.b16 %v787, %v781
    %v1334 = vpack.c.b16 %v788, %v782
    %v1335 = vpack.c.b16 %v789, %v783
    %v1336 = vpack.c.b16 %v790, %v784
    %v1337 = vpack.c.b16 %v791, %v785
    %v1338 = vpack.c.b16 %v798, %v792
    %v1339 = vpack.c.b16 %v799, %v793
    %v1340 = vpack.c.b16 %v800, %v794
    %v1341 = vpack.c.b16 %v801, %v795
    %v1342 = vpack.c.b16 %v802, %v796
    %v1343 = vpack.c.b16 %v803, %v797
    %v1344 = vpack.c.b16 %v810, %v804
    %v1345 = vpack.c.b16 %v811, %v805
    %v1346 = vpack.c.b16 %v812, %v806
    %v1347 = vpack.c.b16 %v813, %v807
    %v1348 = vpack.c.b16 %v814, %v808
    %v1349 = vpack.c.b16 %v815, %v809
    %v1350 = vpack.c.b16 %v822, %v816
    %v1351 = vpack.c.b16 %v823, %v817
    %v1352 = vpack.c.b16 %v824, %v818
    %v1353 = vpack.c.b16 %v825, %v819
    %v1354 = vpack.c.b16 %v826, %v820
    %v1355 = vpack.c.b16 %v827, %v821
    %v1356 = vpack.c.b16 %v834, %v828
    %v1357 = vpack.c.b16 %v835, %v829
    %v1358 = vpack.c.b16 %v836, %v830
    %v1359 = vpack.c.b16 %v837, %v831
    %v1360 = vpack.c.b16 %v838, %v832
    %v1361 = vpack.c.b16 %v839, %v833
    %v1362 = vpack.c.b16 %v846, %v840
    %v1363 = vpack.c.b16 %v847, %v841
    %v1364 = vpack.c.b16 %v848, %v842
    %v1365 = vpack.c.b16 %v849, %v843
    %v1366 = vpack.c.b16 %v850, %v844
    %v1367 = vpack.c.b16 %v851, %v845
    %v1368 = vpack.c.b16 %v858, %v852
    %v1369 = vpack.c.b16 %v859, %v853
    %v1370 = vpack.c.b16 %v860, %v854
    %v1371 = vpack.c.b16 %v861, %v855
    %v1372 = vpack.c.b16 %v862, %v856
    %v1373 = vpack.c.b16 %v863, %v857
    %v1374 = vpack.c.b16 %v870, %v864
    %v1375 = vpack.c.b16 %v871, %v865
    %v1376 = vpack.c.b16 %v872, %v866
    %v1377 = vpack.c.b16 %v873, %v867
    %v1378 = vpack.c.b16 %v874, %v868
    %v1379 = vpack.c.b16 %v875, %v869
    %v1380 = vpack.c.b16 %v882, %v876
    %v1381 = vpack.c.b16 %v883, %v877
    %v1382 = vpack.c.b16 %v884, %v878
    %v1383 = vpack.c.b16 %v885, %v879
    %v1384 = vpack.c.b16 %v886, %v880
    %v1385 = vpack.c.b16 %v887, %v881
    %v1386 = vpack.c.b16 %v894, %v888
    %v1387 = vpack.c.b16 %v895, %v889
    %v1388 = vpack.c.b16 %v896, %v890
    %v1389 = vpack.c.b16 %v897, %v891
    %v1390 = vpack.c.b16 %v898, %v892
    %v1391 = vpack.c.b16 %v899, %v893
    %v1392 = vpack.c.b16 %v906, %v900
    %v1393 = vpack.c.b16 %v907, %v901
    %v1394 = vpack.c.b16 %v908, %v902
    %v1395 = vpack.c.b16 %v909, %v903
    %v1396 = vpack.c.b16 %v910, %v904
    %v1397 = vpack.c.b16 %v911, %v905
    %v1398 = vpack.c.b16 %v918, %v912
    %v1399 = vpack.c.b16 %v919, %v913
    %v1400 = vpack.c.b16 %v920, %v914
    %v1401 = vpack.c.b16 %v921, %v915
    %v1402 = vpack.c.b16 %v922, %v916
    %v1403 = vpack.c.b16 %v923, %v917
    %v1404 = vpack.c.b16 %v930, %v924
    %v1405 = vpack.c.b16 %v931, %v925
    %v1406 = vpack.c.b16 %v932, %v926
    %v1407 = vpack.c.b16 %v933, %v927
    %v1408 = vpack.c.b16 %v934, %v928
    %v1409 = vpack.c.b16 %v935, %v929
    %v1410 = vpack.c.b16 %v942, %v936
    %v1411 = vpack.c.b16 %v943, %v937
    %v1412 = vpack.c.b16 %v944, %v938
    %v1413 = vpack.c.b16 %v945, %v939
    %v1414 = vpack.c.b16 %v946, %v940
    %v1415 = vpack.c.b16 %v947, %v941
    %v1416 = vpack.c.b16 %v954, %v948
    %v1417 = vpack.c.b16 %v955, %v949
    %v1418 = vpack.c.b16 %v956, %v950
    %v1419 = vpack.c.b16 %v957, %v951
    %v1420 = vpack.c.b16 %v958, %v952
    %v1421 = vpack.c.b16 %v959, %v953
    %v1422 = vpack.c.b16 %v966, %v960
    %v1423 = vpack.c.b16 %v967, %v961
    %v1424 = vpack.c.b16 %v968, %v962
    %v1425 = vpack.c.b16 %v969, %v963
    %v1426 = vpack.c.b16 %v970, %v964
    %v1427 = vpack.c.b16 %v971, %v965
    %v1428 = vpack.c.b16 %v978, %v972
    %v1429 = vpack.c.b16 %v979, %v973
    %v1430 = vpack.c.b16 %v980, %v974
    %v1431 = vpack.c.b16 %v981, %v975
    %v1432 = vpack.c.b16 %v982, %v976
    %v1433 = vpack.c.b16 %v983, %v977
    %v1434 = vpack.c.b16 %v990, %v984
    %v1435 = vpack.c.b16 %v991, %v985
    %v1436 = vpack.c.b16 %v992, %v986
    %v1437 = vpack.c.b16 %v993, %v987
    %v1438 = vpack.c.b16 %v994, %v988
    %v1439 = vpack.c.b16 %v995, %v989
    %v1440 = vpack.c.b16 %v1002, %v996
    %v1441 = vpack.c.b16 %v1003, %v997
    %v1442 = vpack.c.b16 %v1004, %v998
    %v1443 = vpack.c.b16 %v1005, %v999
    %v1444 = vpack.c.b16 %v1006, %v1000
    %v1445 = vpack.c.b16 %v1007, %v1001
    %v1446 = vpack.c.b16 %v1014, %v1008
    %v1447 = vpack.c.b16 %v1015, %v1009
    %v1448 = vpack.c.b16 %v1016, %v1010
    %v1449 = vpack.c.b16 %v1017, %v1011
    %v1450 = vpack.c.b16 %v1018, %v1012
    %v1451 = vpack.c.b16 %v1019, %v1013
    %v1452 = vpack.c.b16 %v1026, %v1020
    %v1453 = vpack.c.b16 %v1027, %v1021
    %v1454 = vpack.c.b16 %v1028, %v1022
    %v1455 = vpack.c.b16 %v1029, %v1023
    %v1456 = vpack.c.b16 %v1030, %v1024
    %v1457 = vpack.c.b16 %v1031, %v1025
    %v1458 = vpack.c.b16 %v1038, %v1032
    %v1459 = vpack.c.b16 %v1039, %v1033
    %v1460 = vpack.c.b16 %v1040, %v1034
    %v1461 = vpack.c.b16 %v1041, %v1035
    %v1462 = vpack.c.b16 %v1042, %v1036
    %v1463 = vpack.c.b16 %v1043, %v1037
    %v1464 = vpack.c.b16 %v1050, %v1044
    %v1465 = vpack.c.b16 %v1051, %v1045
    %v1466 = vpack.c.b16 %v1052, %v1046
    %v1467 = vpack.c.b16 %v1053, %v1047
    %v1468 = vpack.c.b16 %v1054, %v1048
    %v1469 = vpack.c.b16 %v1055, %v1049
    %v1470 = vpack.c.b16 %v1062, %v1056
    %v1471 = vpack.c.b16 %v1063, %v1057
    %v1472 = vpack.c.b16 %v1064, %v1058
    %v1473 = vpack.c.b16 %v1065, %v1059
    %v1474 = vpack.c.b16 %v1066, %v1060
    %v1475 = vpack.c.b16 %v1067, %v1061
    %v1476 = vpack.c.b16 %v1074, %v1068
    %v1477 = vpack.c.b16 %v1075, %v1069
    %v1478 = vpack.c.b16 %v1076, %v1070
    %v1479 = vpack.c.b16 %v1077, %v1071
    %v1480 = vpack.c.b16 %v1078, %v1072
    %v1481 = vpack.c.b16 %v1079, %v1073
    %v1482 = vpack.c.b16 %v1086, %v1080
    %v1483 = vpack.c.b16 %v1087, %v1081
    %v1484 = vpack.c.b16 %v1088, %v1082
    %v1485 = vpack.c.b16 %v1089, %v1083
    %v1486 = vpack.c.b16 %v1090, %v1084
    %v1487 = vpack.c.b16 %v1091, %v1085
    %v1488 = vpack.c.b16 %v1098, %v1092
    %v1489 = vpack.c.b16 %v1099, %v1093
    %v1490 = vpack.c.b16 %v1100, %v1094
    %v1491 = vpack.c.b16 %v1101, %v1095
    %v1492 = vpack.c.b16 %v1102, %v1096
    %v1493 = vpack.c.b16 %v1103, %v1097
    %v1494 = vpack.c.b16 %v1110, %v1104
    %v1495 = vpack.c.b16 %v1111, %v1105
    %v1496 = vpack.c.b16 %v1112, %v1106
    %v1497 = vpack.c.b16 %v1113, %v1107
    %v1498 = vpack.c.b16 %v1114, %v1108
    %v1499 = vpack.c.b16 %v1115, %v1109
    %v1500 = vpack.c.b16 %v1122, %v1116
    %v1501 = vpack.c.b16 %v1123, %v1117
    %v1502 = vpack.c.b16 %v1124, %v1118
    %v1503 = vpack.c.b16 %v1125, %v1119
    %v1504 = vpack.c.b16 %v1126, %v1120
    %v1505 = vpack.c.b16 %v1127, %v1121
    %v1506 = vpack.c.b16 %v1134, %v1128
    %v1507 = vpack.c.b16 %v1135, %v1129
    %v1508 = vpack.c.b16 %v1136, %v1130
    %v1509 = vpack.c.b16 %v1137, %v1131
    %v1510 = vpack.c.b16 %v1138, %v1132
    %v1511 = vpack.c.b16 %v1139, %v1133
    %v1512 = vpack.c.b16 %v1146, %v1140
    %v1513 = vpack.c.b16 %v1147, %v1141
    %v1514 = vpack.c.b16 %v1148, %v1142
    %v1515 = vpack.c.b16 %v1149, %v1143
    %v1516 = vpack.c.b16 %v1150, %v1144
    %v1517 = vpack.c.b16 %v1151, %v1145
    %v1518 = vpack.c.b16 %v1158, %v1152
    %v1519 = vpack.c.b16 %v1159, %v1153
    %v1520 = vpack.c.b16 %v1160, %v1154
    %v1521 = vpack.c.b16 %v1161, %v1155
    %v1522 = vpack.c.b16 %v1162, %v1156
    %v1523 = vpack.c.b16 %v1163, %v1157
    %v1524 = vpack.c.b16 %v1170, %v1164
    %v1525 = vpack.c.b16 %v1171, %v1165
    %v1526 = vpack.c.b16 %v1172, %v1166
    %v1527 = vpack.c.b16 %v1173, %v1167
    %v1528 = vpack.c.b16 %v1174, %v1168
    %v1529 = vpack.c.b16 %v1175, %v1169
    %v1530 = vpack.c.b16 %v1182, %v1176
    %v1531 = vpack.c.b16 %v1183, %v1177
    %v1532 = vpack.c.b16 %v1184, %v1178
    %v1533 = vpack.c.b16 %v1185, %v1179
    %v1534 = vpack.c.b16 %v1186, %v1180
    %v1535 = vpack.c.b16 %v1187, %v1181
    %v1536 = vpack.c.b16 %v1194, %v1188
    %v1537 = vpack.c.b16 %v1195, %v1189
    %v1538 = vpack.c.b16 %v1196, %v1190
    %v1539 = vpack.c.b16 %v1197, %v1191
    %v1540 = vpack.c.b16 %v1198, %v1192
    %v1541 = vpack.c.b16 %v1199, %v1193
    %v1542 = vpack.c.b16 %v1206, %v1200
    %v1543 = vpack.c.b16 %v1207, %v1201
    %v1544 = vpack.c.b16 %v1208, %v1202
    %v1545 = vpack.c.b16 %v1209, %v1203
    %v1546 = vpack.c.b16 %v1210, %v1204
    %v1547 = vpack.c.b16 %v1211, %v1205
    %v1548 = vpack.c.b16 %v1218, %v1212
    %v1549 = vpack.c.b16 %v1219, %v1213
    %v1550 = vpack.c.b16 %v1220, %v1214
    %v1551 = vpack.c.b16 %v1221, %v1215
    %v1552 = vpack.c.b16 %v1222, %v1216
    %v1553 = vpack.c.b16 %v1223, %v1217
    %v1554 = vpack.c.b16 %v1230, %v1224
    %v1555 = vpack.c.b16 %v1231, %v1225
    %v1556 = vpack.c.b16 %v1232, %v1226
    %v1557 = vpack.c.b16 %v1233, %v1227
    %v1558 = vpack.c.b16 %v1234, %v1228
    %v1559 = vpack.c.b16 %v1235, %v1229
    %v1560 = vpack.c.b16 %v1242, %v1236
    %v1561 = vpack.c.b16 %v1243, %v1237
    %v1562 = vpack.c.b16 %v1244, %v1238
    %v1563 = vpack.c.b16 %v1245, %v1239
    %v1564 = vpack.c.b16 %v1246, %v1240
    %v1565 = vpack.c.b16 %v1247, %v1241
    %v1566 = vpack.c.b16 %v1254, %v1248
    %v1567 = vpack.c.b16 %v1255, %v1249
    %v1568 = vpack.c.b16 %v1256, %v1250
    %v1569 = vpack.c.b16 %v1257, %v1251
    %v1570 = vpack.c.b16 %v1258, %v1252
    %v1571 = vpack.c.b16 %v1259, %v1253
    %v1572 = vpack.c.b16 %v1266, %v1260
    %v1573 = vpack.c.b16 %v1267, %v1261
    %v1574 = vpack.c.b16 %v1268, %v1262
    %v1575 = vpack.c.b16 %v1269, %v1263
    %v1576 = vpack.c.b16 %v1270, %v1264
    %v1577 = vpack.c.b16 %v1271, %v1265
    %v1578 = vpack.c.b16 %v1278, %v1272
    %v1579 = vpack.c.b16 %v1279, %v1273
    %v1580 = vpack.c.b16 %v1280, %v1274
    %v1581 = vpack.c.b16 %v1281, %v1275
    %v1582 = vpack.c.b16 %v1282, %v1276
    %v1583 = vpack.c.b16 %v1283, %v1277
    %v1584 = vpack.c.b16 %v1290, %v1284
    %v1585 = vpack.c.b16 %v1291, %v1285
    %v1586 = vpack.c.b16 %v1292, %v1286
    %v1587 = vpack.c.b16 %v1293, %v1287
    %v1588 = vpack.c.b16 %v1294, %v1288
    %v1589 = vpack.c.b16 %v1295, %v1289
    %v1590 = vpack.c.b16 %v1302, %v1296
    %v1591 = vpack.c.b16 %v1303, %v1297
    %v1592 = vpack.c.b16 %v1304, %v1298
    %v1593 = vpack.c.b16 %v1305, %v1299
    %v1594 = vpack.c.b16 %v1306, %v1300
    %v1595 = vpack.c.b16 %v1307, %v1301
    %1884 = vmatprep.subr.bf16.mxu0 %v1351
    %1885 = vmatpush1.bf16.msra.mxu0 %v1350
    %1886 = vmatprep.subr.bf16.mxu0 %v1345
    %1887 = vmatpush1.bf16.msra.mxu0 %v1344
    %1888 = vmatprep.subr.bf16.mxu0 %v1339
    %1889 = vmatpush1.bf16.msra.mxu0 %v1338
    %1890 = vmatprep.subr.bf16.mxu0 %v1333
    %1891 = vmatpush1.bf16.msra.mxu0 %v1332
    %1892 = vmatprep.subr.bf16.mxu0 %v1327
    %1893 = vmatpush1.bf16.msra.mxu0 %v1326
    %1894 = vmatprep.subr.bf16.mxu0 %v1321
    %1895 = vmatpush1.bf16.msra.mxu0 %v1320
    %1896 = vmatprep.subr.bf16.mxu0 %v1315
    %1897 = vmatpush1.bf16.msra.mxu0 %v1314
    %1898 = vmatprep.subr.bf16.mxu0 %v1309
    %1899 = vmatpush1.bf16.msra.mxu0 %v1308
    %1900 = vmatprep.subr.bf16.mxu0 %v1399
    %1901 = vmatpush2.bf16.msra.mxu0 %v1398
    %1902 = vmatprep.subr.bf16.mxu0 %v1393
    %1903 = vmatpush2.bf16.msra.mxu0 %v1392
    %1904 = vmatprep.subr.bf16.mxu0 %v1387
    %1905 = vmatpush2.bf16.msra.mxu0 %v1386
    %1906 = vmatprep.subr.bf16.mxu0 %v1381
    %1907 = vmatpush2.bf16.msra.mxu0 %v1380
    %1908 = vmatprep.subr.bf16.mxu0 %v1375
    %1909 = vmatpush2.bf16.msra.mxu0 %v1374
    %1910 = vmatprep.subr.bf16.mxu0 %v1369
    %1911 = vmatpush2.bf16.msra.mxu0 %v1368
    %1912 = vmatprep.subr.bf16.mxu0 %v1363
    %1913 = vmatpush2.bf16.msra.mxu0 %v1362
    %1914 = vmatprep.subr.bf16.mxu0 %v1357
    %1915 = vmatpush2.bf16.msra.mxu0 %v1356
    %1916 = vmatprep.mubr.bf16.mxu0 %v119
    %1917 = vmatmul.mubr.bf16.gmra.mxu0 %v118
    %v1918 = vpop.f32.mrf.mxu0
    %v1919 = vadd.f32 %v417, %v1918
    %v1920 = vpop.f32.mrf.mxu0
    %v1921 = vadd.f32 %v421, %v1920
    %v1922 = vpop.f32.mrf.mxu0
    %v1923 = vpop.f32.mrf.mxu0
    %1924 = vdwg.mxu0
    %1925 = vmatprep.subr.bf16.mxu0 %v1447
    %1926 = vmatpush1.bf16.msra.mxu0 %v1446
    %1927 = vmatprep.subr.bf16.mxu0 %v1441
    %1928 = vmatpush1.bf16.msra.mxu0 %v1440
    %1929 = vmatprep.subr.bf16.mxu0 %v1435
    %1930 = vmatpush1.bf16.msra.mxu0 %v1434
    %1931 = vmatprep.subr.bf16.mxu0 %v1429
    %1932 = vmatpush1.bf16.msra.mxu0 %v1428
    %1933 = vmatprep.subr.bf16.mxu0 %v1423
    %1934 = vmatpush1.bf16.msra.mxu0 %v1422
    %1935 = vmatprep.subr.bf16.mxu0 %v1417
    %1936 = vmatpush1.bf16.msra.mxu0 %v1416
    %1937 = vmatprep.subr.bf16.mxu0 %v1411
    %1938 = vmatpush1.bf16.msra.mxu0 %v1410
    %1939 = vmatprep.subr.bf16.mxu0 %v1405
    %1940 = vmatpush1.bf16.msra.mxu0 %v1404
    %1941 = vmatprep.subr.bf16.mxu0 %v1495
    %1942 = vmatpush2.bf16.msra.mxu0 %v1494
    %1943 = vmatprep.subr.bf16.mxu0 %v1489
    %1944 = vmatpush2.bf16.msra.mxu0 %v1488
    %1945 = vmatprep.subr.bf16.mxu0 %v1483
    %1946 = vmatpush2.bf16.msra.mxu0 %v1482
    %1947 = vmatprep.subr.bf16.mxu0 %v1477
    %1948 = vmatpush2.bf16.msra.mxu0 %v1476
    %1949 = vmatprep.subr.bf16.mxu0 %v1471
    %1950 = vmatpush2.bf16.msra.mxu0 %v1470
    %1951 = vmatprep.subr.bf16.mxu0 %v1465
    %1952 = vmatpush2.bf16.msra.mxu0 %v1464
    %1953 = vmatprep.subr.bf16.mxu0 %v1459
    %1954 = vmatpush2.bf16.msra.mxu0 %v1458
    %1955 = vmatprep.subr.bf16.mxu0 %v1453
    %1956 = vmatpush2.bf16.msra.mxu0 %v1452
    %1957 = vmatprep.mubr.bf16.mxu0 %v121
    %1958 = vmatmul.mubr.bf16.gmra.mxu0 %v120
    %v1959 = vpop.f32.mrf.mxu0
    %v1960 = vadd.f32 %v1919, %v1959
    %v1961 = vpop.f32.mrf.mxu0
    %v1962 = vadd.f32 %v1921, %v1961
    %v1963 = vpop.f32.mrf.mxu0
    %v1964 = vpop.f32.mrf.mxu0
    %1965 = vdwg.mxu0
    %1966 = vmatprep.subr.bf16.mxu0 %v1543
    %1967 = vmatpush1.bf16.msra.mxu0 %v1542
    %1968 = vmatprep.subr.bf16.mxu0 %v1537
    %1969 = vmatpush1.bf16.msra.mxu0 %v1536
    %1970 = vmatprep.subr.bf16.mxu0 %v1531
    %1971 = vmatpush1.bf16.msra.mxu0 %v1530
    %1972 = vmatprep.subr.bf16.mxu0 %v1525
    %1973 = vmatpush1.bf16.msra.mxu0 %v1524
    %1974 = vmatprep.subr.bf16.mxu0 %v1519
    %1975 = vmatpush1.bf16.msra.mxu0 %v1518
    %1976 = vmatprep.subr.bf16.mxu0 %v1513
    %1977 = vmatpush1.bf16.msra.mxu0 %v1512
    %1978 = vmatprep.subr.bf16.mxu0 %v1507
    %1979 = vmatpush1.bf16.msra.mxu0 %v1506
    %1980 = vmatprep.subr.bf16.mxu0 %v1501
    %1981 = vmatpush1.bf16.msra.mxu0 %v1500
    %1982 = vmatprep.subr.bf16.mxu0 %v1591
    %1983 = vmatpush2.bf16.msra.mxu0 %v1590
    %1984 = vmatprep.subr.bf16.mxu0 %v1585
    %1985 = vmatpush2.bf16.msra.mxu0 %v1584
    %1986 = vmatprep.subr.bf16.mxu0 %v1579
    %1987 = vmatpush2.bf16.msra.mxu0 %v1578
    %1988 = vmatprep.subr.bf16.mxu0 %v1573
    %1989 = vmatpush2.bf16.msra.mxu0 %v1572
    %1990 = vmatprep.subr.bf16.mxu0 %v1567
    %1991 = vmatpush2.bf16.msra.mxu0 %v1566
    %1992 = vmatprep.subr.bf16.mxu0 %v1561
    %1993 = vmatpush2.bf16.msra.mxu0 %v1560
    %1994 = vmatprep.subr.bf16.mxu0 %v1555
    %1995 = vmatpush2.bf16.msra.mxu0 %v1554
    %1996 = vmatprep.subr.bf16.mxu0 %v1549
    %1997 = vmatpush2.bf16.msra.mxu0 %v1548
    %1998 = vmatprep.mubr.bf16.mxu0 %v123
    %1999 = vmatmul.mubr.bf16.gmra.mxu0 %v122
    %v2000 = vpop.f32.mrf.mxu0
    %v2001 = vadd.f32 %v1960, %v2000
    %v2002 = vpop.f32.mrf.mxu0
    %v2003 = vadd.f32 %v1962, %v2002
    %v2004 = vpop.f32.mrf.mxu0
    %v2005 = vpop.f32.mrf.mxu0
    %2006 = vdwg.mxu0
    %2007 = vmatprep.subr.bf16.mxu0 %v1353
    %2008 = vmatpush1.bf16.msra.mxu0 %v1352
    %2009 = vmatprep.subr.bf16.mxu0 %v1347
    %2010 = vmatpush1.bf16.msra.mxu0 %v1346
    %2011 = vmatprep.subr.bf16.mxu0 %v1341
    %2012 = vmatpush1.bf16.msra.mxu0 %v1340
    %2013 = vmatprep.subr.bf16.mxu0 %v1335
    %2014 = vmatpush1.bf16.msra.mxu0 %v1334
    %2015 = vmatprep.subr.bf16.mxu0 %v1329
    %2016 = vmatpush1.bf16.msra.mxu0 %v1328
    %2017 = vmatprep.subr.bf16.mxu0 %v1323
    %2018 = vmatpush1.bf16.msra.mxu0 %v1322
    %2019 = vmatprep.subr.bf16.mxu0 %v1317
    %2020 = vmatpush1.bf16.msra.mxu0 %v1316
    %2021 = vmatprep.subr.bf16.mxu0 %v1311
    %2022 = vmatpush1.bf16.msra.mxu0 %v1310
    %2023 = vmatprep.subr.bf16.mxu0 %v1401
    %2024 = vmatpush2.bf16.msra.mxu0 %v1400
    %2025 = vmatprep.subr.bf16.mxu0 %v1395
    %2026 = vmatpush2.bf16.msra.mxu0 %v1394
    %2027 = vmatprep.subr.bf16.mxu0 %v1389
    %2028 = vmatpush2.bf16.msra.mxu0 %v1388
    %2029 = vmatprep.subr.bf16.mxu0 %v1383
    %2030 = vmatpush2.bf16.msra.mxu0 %v1382
    %2031 = vmatprep.subr.bf16.mxu0 %v1377
    %2032 = vmatpush2.bf16.msra.mxu0 %v1376
    %2033 = vmatprep.subr.bf16.mxu0 %v1371
    %2034 = vmatpush2.bf16.msra.mxu0 %v1370
    %2035 = vmatprep.subr.bf16.mxu0 %v1365
    %2036 = vmatpush2.bf16.msra.mxu0 %v1364
    %2037 = vmatprep.subr.bf16.mxu0 %v1359
    %2038 = vmatpush2.bf16.msra.mxu0 %v1358
    %2039 = vmatprep.mubr.bf16.mxu0 %v119
    %2040 = vmatmul.mubr.bf16.gmra.mxu0 %v118
    %v2041 = vpop.f32.mrf.mxu0
    %v2042 = vadd.f32 %v425, %v2041
    %v2043 = vpop.f32.mrf.mxu0
    %v2044 = vadd.f32 %v429, %v2043
    %v2045 = vpop.f32.mrf.mxu0
    %v2046 = vpop.f32.mrf.mxu0
    %2047 = vdwg.mxu0
    %2048 = vmatprep.subr.bf16.mxu0 %v1449
    %2049 = vmatpush1.bf16.msra.mxu0 %v1448
    %2050 = vmatprep.subr.bf16.mxu0 %v1443
    %2051 = vmatpush1.bf16.msra.mxu0 %v1442
    %2052 = vmatprep.subr.bf16.mxu0 %v1437
    %2053 = vmatpush1.bf16.msra.mxu0 %v1436
    %2054 = vmatprep.subr.bf16.mxu0 %v1431
    %2055 = vmatpush1.bf16.msra.mxu0 %v1430
    %2056 = vmatprep.subr.bf16.mxu0 %v1425
    %2057 = vmatpush1.bf16.msra.mxu0 %v1424
    %2058 = vmatprep.subr.bf16.mxu0 %v1419
    %2059 = vmatpush1.bf16.msra.mxu0 %v1418
    %2060 = vmatprep.subr.bf16.mxu0 %v1413
    %2061 = vmatpush1.bf16.msra.mxu0 %v1412
    %2062 = vmatprep.subr.bf16.mxu0 %v1407
    %2063 = vmatpush1.bf16.msra.mxu0 %v1406
    %2064 = vmatprep.subr.bf16.mxu0 %v1497
    %2065 = vmatpush2.bf16.msra.mxu0 %v1496
    %2066 = vmatprep.subr.bf16.mxu0 %v1491
    %2067 = vmatpush2.bf16.msra.mxu0 %v1490
    %2068 = vmatprep.subr.bf16.mxu0 %v1485
    %2069 = vmatpush2.bf16.msra.mxu0 %v1484
    %2070 = vmatprep.subr.bf16.mxu0 %v1479
    %2071 = vmatpush2.bf16.msra.mxu0 %v1478
    %2072 = vmatprep.subr.bf16.mxu0 %v1473
    %2073 = vmatpush2.bf16.msra.mxu0 %v1472
    %2074 = vmatprep.subr.bf16.mxu0 %v1467
    %2075 = vmatpush2.bf16.msra.mxu0 %v1466
    %2076 = vmatprep.subr.bf16.mxu0 %v1461
    %2077 = vmatpush2.bf16.msra.mxu0 %v1460
    %2078 = vmatprep.subr.bf16.mxu0 %v1455
    %2079 = vmatpush2.bf16.msra.mxu0 %v1454
    %2080 = vmatprep.mubr.bf16.mxu0 %v121
    %2081 = vmatmul.mubr.bf16.gmra.mxu0 %v120
    %v2082 = vpop.f32.mrf.mxu0
    %v2083 = vadd.f32 %v2042, %v2082
    %v2084 = vpop.f32.mrf.mxu0
    %v2085 = vadd.f32 %v2044, %v2084
    %v2086 = vpop.f32.mrf.mxu0
    %v2087 = vpop.f32.mrf.mxu0
    %2088 = vdwg.mxu0
    %2089 = vmatprep.subr.bf16.mxu0 %v1545
    %2090 = vmatpush1.bf16.msra.mxu0 %v1544
    %2091 = vmatprep.subr.bf16.mxu0 %v1539
    %2092 = vmatpush1.bf16.msra.mxu0 %v1538
    %2093 = vmatprep.subr.bf16.mxu0 %v1533
    %2094 = vmatpush1.bf16.msra.mxu0 %v1532
    %2095 = vmatprep.subr.bf16.mxu0 %v1527
    %2096 = vmatpush1.bf16.msra.mxu0 %v1526
    %2097 = vmatprep.subr.bf16.mxu0 %v1521
    %2098 = vmatpush1.bf16.msra.mxu0 %v1520
    %2099 = vmatprep.subr.bf16.mxu0 %v1515
    %2100 = vmatpush1.bf16.msra.mxu0 %v1514
    %2101 = vmatprep.subr.bf16.mxu0 %v1509
    %2102 = vmatpush1.bf16.msra.mxu0 %v1508
    %2103 = vmatprep.subr.bf16.mxu0 %v1503
    %2104 = vmatpush1.bf16.msra.mxu0 %v1502
    %2105 = vmatprep.subr.bf16.mxu0 %v1593
    %2106 = vmatpush2.bf16.msra.mxu0 %v1592
    %2107 = vmatprep.subr.bf16.mxu0 %v1587
    %2108 = vmatpush2.bf16.msra.mxu0 %v1586
    %2109 = vmatprep.subr.bf16.mxu0 %v1581
    %2110 = vmatpush2.bf16.msra.mxu0 %v1580
    %2111 = vmatprep.subr.bf16.mxu0 %v1575
    %2112 = vmatpush2.bf16.msra.mxu0 %v1574
    %2113 = vmatprep.subr.bf16.mxu0 %v1569
    %2114 = vmatpush2.bf16.msra.mxu0 %v1568
    %2115 = vmatprep.subr.bf16.mxu0 %v1563
    %2116 = vmatpush2.bf16.msra.mxu0 %v1562
    %2117 = vmatprep.subr.bf16.mxu0 %v1557
    %2118 = vmatpush2.bf16.msra.mxu0 %v1556
    %2119 = vmatprep.subr.bf16.mxu0 %v1551
    %2120 = vmatpush2.bf16.msra.mxu0 %v1550
    %2121 = vmatprep.mubr.bf16.mxu0 %v123
    %2122 = vmatmul.mubr.bf16.gmra.mxu0 %v122
    %v2123 = vpop.f32.mrf.mxu0
    %v2124 = vadd.f32 %v2083, %v2123
    %v2125 = vpop.f32.mrf.mxu0
    %v2126 = vadd.f32 %v2085, %v2125
    %v2127 = vpop.f32.mrf.mxu0
    %v2128 = vpop.f32.mrf.mxu0
    %2129 = vdwg.mxu0
    %2130 = vmatprep.subr.bf16.mxu0 %v1355
    %2131 = vmatpush1.bf16.msra.mxu0 %v1354
    %2132 = vmatprep.subr.bf16.mxu0 %v1349
    %2133 = vmatpush1.bf16.msra.mxu0 %v1348
    %2134 = vmatprep.subr.bf16.mxu0 %v1343
    %2135 = vmatpush1.bf16.msra.mxu0 %v1342
    %2136 = vmatprep.subr.bf16.mxu0 %v1337
    %2137 = vmatpush1.bf16.msra.mxu0 %v1336
    %2138 = vmatprep.subr.bf16.mxu0 %v1331
    %2139 = vmatpush1.bf16.msra.mxu0 %v1330
    %2140 = vmatprep.subr.bf16.mxu0 %v1325
    %2141 = vmatpush1.bf16.msra.mxu0 %v1324
    %2142 = vmatprep.subr.bf16.mxu0 %v1319
    %2143 = vmatpush1.bf16.msra.mxu0 %v1318
    %2144 = vmatprep.subr.bf16.mxu0 %v1313
    %2145 = vmatpush1.bf16.msra.mxu0 %v1312
    %2146 = vmatprep.subr.bf16.mxu0 %v1403
    %2147 = vmatpush2.bf16.msra.mxu0 %v1402
    %2148 = vmatprep.subr.bf16.mxu0 %v1397
    %2149 = vmatpush2.bf16.msra.mxu0 %v1396
    %2150 = vmatprep.subr.bf16.mxu0 %v1391
    %2151 = vmatpush2.bf16.msra.mxu0 %v1390
    %2152 = vmatprep.subr.bf16.mxu0 %v1385
    %2153 = vmatpush2.bf16.msra.mxu0 %v1384
    %2154 = vmatprep.subr.bf16.mxu0 %v1379
    %2155 = vmatpush2.bf16.msra.mxu0 %v1378
    %2156 = vmatprep.subr.bf16.mxu0 %v1373
    %2157 = vmatpush2.bf16.msra.mxu0 %v1372
    %2158 = vmatprep.subr.bf16.mxu0 %v1367
    %2159 = vmatpush2.bf16.msra.mxu0 %v1366
    %2160 = vmatprep.subr.bf16.mxu0 %v1361
    %2161 = vmatpush2.bf16.msra.mxu0 %v1360
    %2162 = vmatprep.mubr.bf16.mxu0 %v119
    %2163 = vmatmul.mubr.bf16.gmra.mxu0 %v118
    %v2164 = vpop.f32.mrf.mxu0
    %v2165 = vadd.f32 %v433, %v2164
    %v2166 = vpop.f32.mrf.mxu0
    %v2167 = vadd.f32 %v437, %v2166
    %v2168 = vpop.f32.mrf.mxu0
    %v2169 = vpop.f32.mrf.mxu0
    %2170 = vdwg.mxu0
    %2171 = vmatprep.subr.bf16.mxu0 %v1451
    %2172 = vmatpush1.bf16.msra.mxu0 %v1450
    %2173 = vmatprep.subr.bf16.mxu0 %v1445
    %2174 = vmatpush1.bf16.msra.mxu0 %v1444
    %2175 = vmatprep.subr.bf16.mxu0 %v1439
    %2176 = vmatpush1.bf16.msra.mxu0 %v1438
    %2177 = vmatprep.subr.bf16.mxu0 %v1433
    %2178 = vmatpush1.bf16.msra.mxu0 %v1432
    %2179 = vmatprep.subr.bf16.mxu0 %v1427
    %2180 = vmatpush1.bf16.msra.mxu0 %v1426
    %2181 = vmatprep.subr.bf16.mxu0 %v1421
    %2182 = vmatpush1.bf16.msra.mxu0 %v1420
    %2183 = vmatprep.subr.bf16.mxu0 %v1415
    %2184 = vmatpush1.bf16.msra.mxu0 %v1414
    %2185 = vmatprep.subr.bf16.mxu0 %v1409
    %2186 = vmatpush1.bf16.msra.mxu0 %v1408
    %2187 = vmatprep.subr.bf16.mxu0 %v1499
    %2188 = vmatpush2.bf16.msra.mxu0 %v1498
    %2189 = vmatprep.subr.bf16.mxu0 %v1493
    %2190 = vmatpush2.bf16.msra.mxu0 %v1492
    %2191 = vmatprep.subr.bf16.mxu0 %v1487
    %2192 = vmatpush2.bf16.msra.mxu0 %v1486
    %2193 = vmatprep.subr.bf16.mxu0 %v1481
    %2194 = vmatpush2.bf16.msra.mxu0 %v1480
    %2195 = vmatprep.subr.bf16.mxu0 %v1475
    %2196 = vmatpush2.bf16.msra.mxu0 %v1474
    %2197 = vmatprep.subr.bf16.mxu0 %v1469
    %2198 = vmatpush2.bf16.msra.mxu0 %v1468
    %2199 = vmatprep.subr.bf16.mxu0 %v1463
    %2200 = vmatpush2.bf16.msra.mxu0 %v1462
    %2201 = vmatprep.subr.bf16.mxu0 %v1457
    %2202 = vmatpush2.bf16.msra.mxu0 %v1456
    %2203 = vmatprep.mubr.bf16.mxu0 %v121
    %2204 = vmatmul.mubr.bf16.gmra.mxu0 %v120
    %v2205 = vpop.f32.mrf.mxu0
    %v2206 = vadd.f32 %v2165, %v2205
    %v2207 = vpop.f32.mrf.mxu0
    %v2208 = vadd.f32 %v2167, %v2207
    %v2209 = vpop.f32.mrf.mxu0
    %v2210 = vpop.f32.mrf.mxu0
    %2211 = vdwg.mxu0
    %2212 = vmatprep.subr.bf16.mxu0 %v1547
    %2213 = vmatpush1.bf16.msra.mxu0 %v1546
    %2214 = vmatprep.subr.bf16.mxu0 %v1541
    %2215 = vmatpush1.bf16.msra.mxu0 %v1540
    %2216 = vmatprep.subr.bf16.mxu0 %v1535
    %2217 = vmatpush1.bf16.msra.mxu0 %v1534
    %2218 = vmatprep.subr.bf16.mxu0 %v1529
    %2219 = vmatpush1.bf16.msra.mxu0 %v1528
    %2220 = vmatprep.subr.bf16.mxu0 %v1523
    %2221 = vmatpush1.bf16.msra.mxu0 %v1522
    %2222 = vmatprep.subr.bf16.mxu0 %v1517
    %2223 = vmatpush1.bf16.msra.mxu0 %v1516
    %2224 = vmatprep.subr.bf16.mxu0 %v1511
    %2225 = vmatpush1.bf16.msra.mxu0 %v1510
    %2226 = vmatprep.subr.bf16.mxu0 %v1505
    %2227 = vmatpush1.bf16.msra.mxu0 %v1504
    %2228 = vmatprep.subr.bf16.mxu0 %v1595
    %2229 = vmatpush2.bf16.msra.mxu0 %v1594
    %2230 = vmatprep.subr.bf16.mxu0 %v1589
    %2231 = vmatpush2.bf16.msra.mxu0 %v1588
    %2232 = vmatprep.subr.bf16.mxu0 %v1583
    %2233 = vmatpush2.bf16.msra.mxu0 %v1582
    %2234 = vmatprep.subr.bf16.mxu0 %v1577
    %2235 = vmatpush2.bf16.msra.mxu0 %v1576
    %2236 = vmatprep.subr.bf16.mxu0 %v1571
    %2237 = vmatpush2.bf16.msra.mxu0 %v1570
    %2238 = vmatprep.subr.bf16.mxu0 %v1565
    %2239 = vmatpush2.bf16.msra.mxu0 %v1564
    %2240 = vmatprep.subr.bf16.mxu0 %v1559
    %2241 = vmatpush2.bf16.msra.mxu0 %v1558
    %2242 = vmatprep.subr.bf16.mxu0 %v1553
    %2243 = vmatpush2.bf16.msra.mxu0 %v1552
    %2244 = vmatprep.mubr.bf16.mxu0 %v123
    %2245 = vmatmul.mubr.bf16.gmra.mxu0 %v122
    %v2246 = vpop.f32.mrf.mxu0
    %v2247 = vadd.f32 %v2206, %v2246
    %v2248 = vpop.f32.mrf.mxu0
    %v2249 = vadd.f32 %v2208, %v2248
    %v2250 = vpop.f32.mrf.mxu0
    %v2251 = vpop.f32.mrf.mxu0
    %2252 = vdwg.mxu0
    %v2253 = vsub.f32 0.0, %v2001
    %v2254 = vsub.f32 0.0, %v2003
    %v2255 = vsub.f32 0.0, %v2124
    %v2256 = vsub.f32 0.0, %v2126
    %v2257 = vsub.f32 0.0, %v2247
    %v2258 = vsub.f32 0.0, %v2249
    %v2259 = vmul.f32 %v2253, 1.442695
    %v2260 = vpow.pop %v2259
    %v2261 = vmul.f32 %v2254, 1.442695
    %v2262 = vpow.pop %v2261
    %v2263 = vmul.f32 %v2255, 1.442695
    %v2264 = vpow.pop %v2263
    %v2265 = vmul.f32 %v2256, 1.442695
    %v2266 = vpow.pop %v2265
    %v2267 = vmul.f32 %v2257, 1.442695
    %v2268 = vpow.pop %v2267
    %v2269 = vmul.f32 %v2258, 1.442695
    %v2270 = vpow.pop %v2269
    %v2271 = vadd.f32 %v2260, 1.0
    %v2272 = vadd.f32 %v2262, 1.0
    %v2273 = vadd.f32 %v2264, 1.0
    %v2274 = vadd.f32 %v2266, 1.0
    %v2275 = vadd.f32 %v2268, 1.0
    %v2276 = vadd.f32 %v2270, 1.0
    %v2277 = vrcp.pop %v2271
    %v2278 = vrcp.pop %v2272
    %v2279 = vrcp.pop %v2273
    %v2280 = vrcp.pop %v2274
    %v2281 = vrcp.pop %v2275
    %v2282 = vrcp.pop %v2276
    %v2283 = vmul.f32 %v2001, %v2277
    %v2284 = vmul.f32 %v2003, %v2278
    %v2285 = vmul.f32 %v2124, %v2279
    %v2286 = vmul.f32 %v2126, %v2280
    %v2287 = vmul.f32 %v2247, %v2281
    %v2288 = vmul.f32 %v2249, %v2282
    %v2289 = vadd.f32 %v2283, %v2284
    %v2290 = vadd.f32 %v2289, %v2285
    %v2291 = vadd.f32 %v2290, %v2286
    %v2292 = vadd.f32 %v2291, %v2287
    %v2293 = vadd.f32 %v2292, %v2288
    %2294 = vadd.xlane.f32.xlu0 %v2293
    %v2295 = vpop.xlane.xlu0 %2294
    %v2296 = vrcp.pop 768.0
    %v2297 = vmul.f32 %v2295, %v2296
    %v2298 = vsub.f32 %v2283, %v2297
    %v2299 = vsub.f32 %v2284, %v2297
    %v2300 = vsub.f32 %v2285, %v2297
    %v2301 = vsub.f32 %v2286, %v2297
    %v2302 = vsub.f32 %v2287, %v2297
    %v2303 = vsub.f32 %v2288, %v2297
    %v2304 = vmul.f32 %v2298, %v2298
    %v2305 = vmul.f32 %v2299, %v2299
    %v2306 = vmul.f32 %v2300, %v2300
    %v2307 = vmul.f32 %v2301, %v2301
    %v2308 = vmul.f32 %v2302, %v2302
    %v2309 = vmul.f32 %v2303, %v2303
    %v2310 = vadd.f32 %v2304, %v2305
    %v2311 = vadd.f32 %v2310, %v2306
    %v2312 = vadd.f32 %v2311, %v2307
    %v2313 = vadd.f32 %v2312, %v2308
    %v2314 = vadd.f32 %v2313, %v2309
    %2315 = vadd.xlane.f32.xlu0 %v2314
    %v2316 = vpop.xlane.xlu0 %2315
    %v2317 = vmul.f32 %v2316, %v2296
    %v2318 = vadd.f32 %v2317, 1e-05
    %v2319 = vrsqrt.pop %v2318
    %v2320 = vmul.f32 %v2298, %v2319
    %v2321 = vmul.f32 %v2299, %v2319
    %v2322 = vmul.f32 %v2300, %v2319
    %v2323 = vmul.f32 %v2301, %v2319
    %v2324 = vmul.f32 %v2302, %v2319
    %v2325 = vmul.f32 %v2303, %v2319
    %v2326 = vld [vmem:[#allocation7] sm:$0x3f]
    %v2328 = vlaneseq
    %v2329 = vshrl.u32 %v2328, 7
    %v2330 = vsub.s32 0, %v2329
    %v2331 = vrot.slane %v2326, %v2330
    %v2332 = vlaneseq
    %v2333 = vshrl.u32 %v2332, 7
    %v2334 = vsub.s32 1, %v2333
    %v2335 = vrot.slane %v2326, %v2334
    %v2336 = vlaneseq
    %v2337 = vshrl.u32 %v2336, 7
    %v2338 = vsub.s32 2, %v2337
    %v2339 = vrot.slane %v2326, %v2338
    %v2340 = vlaneseq
    %v2341 = vshrl.u32 %v2340, 7
    %v2342 = vsub.s32 3, %v2341
    %v2343 = vrot.slane %v2326, %v2342
    %v2344 = vlaneseq
    %v2345 = vshrl.u32 %v2344, 7
    %v2346 = vsub.s32 4, %v2345
    %v2347 = vrot.slane %v2326, %v2346
    %v2348 = vlaneseq
    %v2349 = vshrl.u32 %v2348, 7
    %v2350 = vsub.s32 5, %v2349
    %v2351 = vrot.slane %v2326, %v2350
    %v2358 = vmul.f32 %v2320, %v2331
    %v2359 = vmul.f32 %v2321, %v2335
    %v2360 = vmul.f32 %v2322, %v2339
    %v2361 = vmul.f32 %v2323, %v2343
    %v2362 = vmul.f32 %v2324, %v2347
    %v2363 = vmul.f32 %v2325, %v2351
    %v2364 = vld [vmem:[#allocation9] sm:$0x3f]
    %v2366 = vlaneseq
    %v2367 = vshrl.u32 %v2366, 7
    %v2368 = vsub.s32 0, %v2367
    %v2369 = vrot.slane %v2364, %v2368
    %v2370 = vlaneseq
    %v2371 = vshrl.u32 %v2370, 7
    %v2372 = vsub.s32 1, %v2371
    %v2373 = vrot.slane %v2364, %v2372
    %v2374 = vlaneseq
    %v2375 = vshrl.u32 %v2374, 7
    %v2376 = vsub.s32 2, %v2375
    %v2377 = vrot.slane %v2364, %v2376
    %v2378 = vlaneseq
    %v2379 = vshrl.u32 %v2378, 7
    %v2380 = vsub.s32 3, %v2379
    %v2381 = vrot.slane %v2364, %v2380
    %v2382 = vlaneseq
    %v2383 = vshrl.u32 %v2382, 7
    %v2384 = vsub.s32 4, %v2383
    %v2385 = vrot.slane %v2364, %v2384
    %v2386 = vlaneseq
    %v2387 = vshrl.u32 %v2386, 7
    %v2388 = vsub.s32 5, %v2387
    %v2389 = vrot.slane %v2364, %v2388
    %v2396 = vadd.f32 %v2358, %v2369
    %v2397 = vadd.f32 %v2359, %v2373
    %v2398 = vadd.f32 %v2360, %v2377
    %v2399 = vadd.f32 %v2361, %v2381
    %v2400 = vadd.f32 %v2362, %v2385
    %v2401 = vadd.f32 %v2363, %v2389
    %v2402 = vpack.c.bf16 %v2396, %v2396
    %v2403 = vpack.c.bf16 %v2397, %v2397
    %v2404 = vpack.c.bf16 %v2398, %v2398
    %v2405 = vpack.c.bf16 %v2399, %v2399
    %v2406 = vpack.c.bf16 %v2400, %v2400
    %v2407 = vpack.c.bf16 %v2401, %v2401
    %v2408 = vld [vmem:[#allocation10] sm:$0xf]
    %v2409 = vld [vmem:[#allocation10 + $0x4] sm:$0xf]
    %v2410 = vld [vmem:[#allocation10 + $0x8] sm:$0xf]
    %v2411 = vld [vmem:[#allocation10 + $0xc] sm:$0xf]
    %v2412 = vld [vmem:[#allocation10 + $0x10] sm:$0xf]
    %v2413 = vld [vmem:[#allocation10 + $0x14] sm:$0xf]
    %v2414 = vld [vmem:[#allocation10 + $0x18] sm:$0xf]
    %v2415 = vld [vmem:[#allocation10 + $0x1c] sm:$0xf]
    %v2416 = vld [vmem:[#allocation10 + $0x20] sm:$0xf]
    %v2417 = vld [vmem:[#allocation10 + $0x24] sm:$0xf]
    %v2418 = vld [vmem:[#allocation10 + $0x28] sm:$0xf]
    %v2419 = vld [vmem:[#allocation10 + $0x2c] sm:$0xf]
    %v2420 = vld [vmem:[#allocation10 + $0x30] sm:$0xf]
    %v2421 = vld [vmem:[#allocation10 + $0x34] sm:$0xf]
    %v2422 = vld [vmem:[#allocation10 + $0x38] sm:$0xf]
    %v2423 = vld [vmem:[#allocation10 + $0x3c] sm:$0xf]
    %v2424 = vld [vmem:[#allocation10 + $0x40] sm:$0xf]
    %v2425 = vld [vmem:[#allocation10 + $0x44] sm:$0xf]
    %v2426 = vld [vmem:[#allocation10 + $0x48] sm:$0xf]
    %v2427 = vld [vmem:[#allocation10 + $0x4c] sm:$0xf]
    %v2428 = vld [vmem:[#allocation10 + $0x50] sm:$0xf]
    %v2429 = vld [vmem:[#allocation10 + $0x54] sm:$0xf]
    %v2430 = vld [vmem:[#allocation10 + $0x58] sm:$0xf]
    %v2431 = vld [vmem:[#allocation10 + $0x5c] sm:$0xf]
    %v2432 = vld [vmem:[#allocation10 + $0x60] sm:$0xf]
    %v2433 = vld [vmem:[#allocation10 + $0x64] sm:$0xf]
    %v2434 = vld [vmem:[#allocation10 + $0x68] sm:$0xf]
    %v2435 = vld [vmem:[#allocation10 + $0x6c] sm:$0xf]
    %v2436 = vld [vmem:[#allocation10 + $0x70] sm:$0xf]
    %v2437 = vld [vmem:[#allocation10 + $0x74] sm:$0xf]
    %v2438 = vld [vmem:[#allocation10 + $0x78] sm:$0xf]
    %v2439 = vld [vmem:[#allocation10 + $0x7c] sm:$0xf]
    %v2440 = vld [vmem:[#allocation10 + $0x80] sm:$0xf]
    %v2441 = vld [vmem:[#allocation10 + $0x84] sm:$0xf]
    %v2442 = vld [vmem:[#allocation10 + $0x88] sm:$0xf]
    %v2443 = vld [vmem:[#allocation10 + $0x8c] sm:$0xf]
    %v2444 = vld [vmem:[#allocation10 + $0x90] sm:$0xf]
    %v2445 = vld [vmem:[#allocation10 + $0x94] sm:$0xf]
    %v2446 = vld [vmem:[#allocation10 + $0x98] sm:$0xf]
    %v2447 = vld [vmem:[#allocation10 + $0x9c] sm:$0xf]
    %v2448 = vld [vmem:[#allocation10 + $0xa0] sm:$0xf]
    %v2449 = vld [vmem:[#allocation10 + $0xa4] sm:$0xf]
    %v2450 = vld [vmem:[#allocation10 + $0xa8] sm:$0xf]
    %v2451 = vld [vmem:[#allocation10 + $0xac] sm:$0xf]
    %v2452 = vld [vmem:[#allocation10 + $0xb0] sm:$0xf]
    %v2453 = vld [vmem:[#allocation10 + $0xb4] sm:$0xf]
    %v2454 = vld [vmem:[#allocation10 + $0xb8] sm:$0xf]
    %v2455 = vld [vmem:[#allocation10 + $0xbc] sm:$0xf]
    %v2456 = vld [vmem:[#allocation10 + $0xc0] sm:$0xf]
    %v2457 = vld [vmem:[#allocation10 + $0xc4] sm:$0xf]
    %v2458 = vld [vmem:[#allocation10 + $0xc8] sm:$0xf]
    %v2459 = vld [vmem:[#allocation10 + $0xcc] sm:$0xf]
    %v2460 = vld [vmem:[#allocation10 + $0xd0] sm:$0xf]
    %v2461 = vld [vmem:[#allocation10 + $0xd4] sm:$0xf]
    %v2462 = vld [vmem:[#allocation10 + $0xd8] sm:$0xf]
    %v2463 = vld [vmem:[#allocation10 + $0xdc] sm:$0xf]
    %v2464 = vld [vmem:[#allocation10 + $0xe0] sm:$0xf]
    %v2465 = vld [vmem:[#allocation10 + $0xe4] sm:$0xf]
    %v2466 = vld [vmem:[#allocation10 + $0xe8] sm:$0xf]
    %v2467 = vld [vmem:[#allocation10 + $0xec] sm:$0xf]
    %v2468 = vld [vmem:[#allocation10 + $0xf0] sm:$0xf]
    %v2469 = vld [vmem:[#allocation10 + $0xf4] sm:$0xf]
    %v2470 = vld [vmem:[#allocation10 + $0xf8] sm:$0xf]
    %v2471 = vld [vmem:[#allocation10 + $0xfc] sm:$0xf]
    %v2472 = vld [vmem:[#allocation10 + $0x100] sm:$0xf]
    %v2473 = vld [vmem:[#allocation10 + $0x104] sm:$0xf]
    %v2474 = vld [vmem:[#allocation10 + $0x108] sm:$0xf]
    %v2475 = vld [vmem:[#allocation10 + $0x10c] sm:$0xf]
    %v2476 = vld [vmem:[#allocation10 + $0x110] sm:$0xf]
    %v2477 = vld [vmem:[#allocation10 + $0x114] sm:$0xf]
    %v2478 = vld [vmem:[#allocation10 + $0x118] sm:$0xf]
    %v2479 = vld [vmem:[#allocation10 + $0x11c] sm:$0xf]
    %v2480 = vld [vmem:[#allocation10 + $0x120] sm:$0xf]
    %v2481 = vld [vmem:[#allocation10 + $0x124] sm:$0xf]
    %v2482 = vld [vmem:[#allocation10 + $0x128] sm:$0xf]
    %v2483 = vld [vmem:[#allocation10 + $0x12c] sm:$0xf]
    %v2484 = vld [vmem:[#allocation10 + $0x130] sm:$0xf]
    %v2485 = vld [vmem:[#allocation10 + $0x134] sm:$0xf]
    %v2486 = vld [vmem:[#allocation10 + $0x138] sm:$0xf]
    %v2487 = vld [vmem:[#allocation10 + $0x13c] sm:$0xf]
    %v2488 = vld [vmem:[#allocation10 + $0x140] sm:$0xf]
    %v2489 = vld [vmem:[#allocation10 + $0x144] sm:$0xf]
    %v2490 = vld [vmem:[#allocation10 + $0x148] sm:$0xf]
    %v2491 = vld [vmem:[#allocation10 + $0x14c] sm:$0xf]
    %v2492 = vld [vmem:[#allocation10 + $0x150] sm:$0xf]
    %v2493 = vld [vmem:[#allocation10 + $0x154] sm:$0xf]
    %v2494 = vld [vmem:[#allocation10 + $0x158] sm:$0xf]
    %v2495 = vld [vmem:[#allocation10 + $0x15c] sm:$0xf]
    %v2496 = vld [vmem:[#allocation10 + $0x160] sm:$0xf]
    %v2497 = vld [vmem:[#allocation10 + $0x164] sm:$0xf]
    %v2498 = vld [vmem:[#allocation10 + $0x168] sm:$0xf]
    %v2499 = vld [vmem:[#allocation10 + $0x16c] sm:$0xf]
    %v2500 = vld [vmem:[#allocation10 + $0x170] sm:$0xf]
    %v2501 = vld [vmem:[#allocation10 + $0x174] sm:$0xf]
    %v2502 = vld [vmem:[#allocation10 + $0x178] sm:$0xf]
    %v2503 = vld [vmem:[#allocation10 + $0x17c] sm:$0xf]
    %v2504 = vld [vmem:[#allocation12] sm:$0x1]
    %v2506 = vlaneseq
    %v2507 = vshrl.u32 %v2506, 7
    %v2508 = vsub.s32 0, %v2507
    %v2509 = vrot.slane %v2504, %v2508
    %v2607 = vunpack.c.l.b16 %v2408
    %v2608 = vunpack.c.l.b16 %v2409
    %v2609 = vunpack.c.l.b16 %v2410
    %v2610 = vunpack.c.l.b16 %v2411
    %v2611 = vunpack.c.l.b16 %v2412
    %v2612 = vunpack.c.l.b16 %v2413
    %v2613 = vunpack.c.l.b16 %v2414
    %v2614 = vunpack.c.l.b16 %v2415
    %v2615 = vunpack.c.l.b16 %v2416
    %v2616 = vunpack.c.l.b16 %v2417
    %v2617 = vunpack.c.l.b16 %v2418
    %v2618 = vunpack.c.l.b16 %v2419
    %v2619 = vunpack.c.l.b16 %v2420
    %v2620 = vunpack.c.l.b16 %v2421
    %v2621 = vunpack.c.l.b16 %v2422
    %v2622 = vunpack.c.l.b16 %v2423
    %v2623 = vunpack.c.l.b16 %v2424
    %v2624 = vunpack.c.l.b16 %v2425
    %v2625 = vunpack.c.l.b16 %v2426
    %v2626 = vunpack.c.l.b16 %v2427
    %v2627 = vunpack.c.l.b16 %v2428
    %v2628 = vunpack.c.l.b16 %v2429
    %v2629 = vunpack.c.l.b16 %v2430
    %v2630 = vunpack.c.l.b16 %v2431
    %v2631 = vunpack.c.l.b16 %v2432
    %v2632 = vunpack.c.l.b16 %v2433
    %v2633 = vunpack.c.l.b16 %v2434
    %v2634 = vunpack.c.l.b16 %v2435
    %v2635 = vunpack.c.l.b16 %v2436
    %v2636 = vunpack.c.l.b16 %v2437
    %v2637 = vunpack.c.l.b16 %v2438
    %v2638 = vunpack.c.l.b16 %v2439
    %v2639 = vunpack.c.l.b16 %v2440
    %v2640 = vunpack.c.l.b16 %v2441
    %v2641 = vunpack.c.l.b16 %v2442
    %v2642 = vunpack.c.l.b16 %v2443
    %v2643 = vunpack.c.l.b16 %v2444
    %v2644 = vunpack.c.l.b16 %v2445
    %v2645 = vunpack.c.l.b16 %v2446
    %v2646 = vunpack.c.l.b16 %v2447
    %v2647 = vunpack.c.l.b16 %v2448
    %v2648 = vunpack.c.l.b16 %v2449
    %v2649 = vunpack.c.l.b16 %v2450
    %v2650 = vunpack.c.l.b16 %v2451
    %v2651 = vunpack.c.l.b16 %v2452
    %v2652 = vunpack.c.l.b16 %v2453
    %v2653 = vunpack.c.l.b16 %v2454
    %v2654 = vunpack.c.l.b16 %v2455
    %v2655 = vunpack.c.l.b16 %v2456
    %v2656 = vunpack.c.l.b16 %v2457
    %v2657 = vunpack.c.l.b16 %v2458
    %v2658 = vunpack.c.l.b16 %v2459
    %v2659 = vunpack.c.l.b16 %v2460
    %v2660 = vunpack.c.l.b16 %v2461
    %v2661 = vunpack.c.l.b16 %v2462
    %v2662 = vunpack.c.l.b16 %v2463
    %v2663 = vunpack.c.l.b16 %v2464
    %v2664 = vunpack.c.l.b16 %v2465
    %v2665 = vunpack.c.l.b16 %v2466
    %v2666 = vunpack.c.l.b16 %v2467
    %v2667 = vunpack.c.l.b16 %v2468
    %v2668 = vunpack.c.l.b16 %v2469
    %v2669 = vunpack.c.l.b16 %v2470
    %v2670 = vunpack.c.l.b16 %v2471
    %v2671 = vunpack.c.l.b16 %v2472
    %v2672 = vunpack.c.l.b16 %v2473
    %v2673 = vunpack.c.l.b16 %v2474
    %v2674 = vunpack.c.l.b16 %v2475
    %v2675 = vunpack.c.l.b16 %v2476
    %v2676 = vunpack.c.l.b16 %v2477
    %v2677 = vunpack.c.l.b16 %v2478
    %v2678 = vunpack.c.l.b16 %v2479
    %v2679 = vunpack.c.l.b16 %v2480
    %v2680 = vunpack.c.l.b16 %v2481
    %v2681 = vunpack.c.l.b16 %v2482
    %v2682 = vunpack.c.l.b16 %v2483
    %v2683 = vunpack.c.l.b16 %v2484
    %v2684 = vunpack.c.l.b16 %v2485
    %v2685 = vunpack.c.l.b16 %v2486
    %v2686 = vunpack.c.l.b16 %v2487
    %v2687 = vunpack.c.l.b16 %v2488
    %v2688 = vunpack.c.l.b16 %v2489
    %v2689 = vunpack.c.l.b16 %v2490
    %v2690 = vunpack.c.l.b16 %v2491
    %v2691 = vunpack.c.l.b16 %v2492
    %v2692 = vunpack.c.l.b16 %v2493
    %v2693 = vunpack.c.l.b16 %v2494
    %v2694 = vunpack.c.l.b16 %v2495
    %v2695 = vunpack.c.l.b16 %v2496
    %v2696 = vunpack.c.l.b16 %v2497
    %v2697 = vunpack.c.l.b16 %v2498
    %v2698 = vunpack.c.l.b16 %v2499
    %v2699 = vunpack.c.l.b16 %v2500
    %v2700 = vunpack.c.l.b16 %v2501
    %v2701 = vunpack.c.l.b16 %v2502
    %v2702 = vunpack.c.l.b16 %v2503
    %v2703 = vpack.c.b16 %v2608, %v2607
    %v2704 = vpack.c.b16 %v2610, %v2609
    %v2705 = vpack.c.b16 %v2612, %v2611
    %v2706 = vpack.c.b16 %v2614, %v2613
    %v2707 = vpack.c.b16 %v2616, %v2615
    %v2708 = vpack.c.b16 %v2618, %v2617
    %v2709 = vpack.c.b16 %v2620, %v2619
    %v2710 = vpack.c.b16 %v2622, %v2621
    %v2711 = vpack.c.b16 %v2624, %v2623
    %v2712 = vpack.c.b16 %v2626, %v2625
    %v2713 = vpack.c.b16 %v2628, %v2627
    %v2714 = vpack.c.b16 %v2630, %v2629
    %v2715 = vpack.c.b16 %v2632, %v2631
    %v2716 = vpack.c.b16 %v2634, %v2633
    %v2717 = vpack.c.b16 %v2636, %v2635
    %v2718 = vpack.c.b16 %v2638, %v2637
    %v2719 = vpack.c.b16 %v2640, %v2639
    %v2720 = vpack.c.b16 %v2642, %v2641
    %v2721 = vpack.c.b16 %v2644, %v2643
    %v2722 = vpack.c.b16 %v2646, %v2645
    %v2723 = vpack.c.b16 %v2648, %v2647
    %v2724 = vpack.c.b16 %v2650, %v2649
    %v2725 = vpack.c.b16 %v2652, %v2651
    %v2726 = vpack.c.b16 %v2654, %v2653
    %v2727 = vpack.c.b16 %v2656, %v2655
    %v2728 = vpack.c.b16 %v2658, %v2657
    %v2729 = vpack.c.b16 %v2660, %v2659
    %v2730 = vpack.c.b16 %v2662, %v2661
    %v2731 = vpack.c.b16 %v2664, %v2663
    %v2732 = vpack.c.b16 %v2666, %v2665
    %v2733 = vpack.c.b16 %v2668, %v2667
    %v2734 = vpack.c.b16 %v2670, %v2669
    %v2735 = vpack.c.b16 %v2672, %v2671
    %v2736 = vpack.c.b16 %v2674, %v2673
    %v2737 = vpack.c.b16 %v2676, %v2675
    %v2738 = vpack.c.b16 %v2678, %v2677
    %v2739 = vpack.c.b16 %v2680, %v2679
    %v2740 = vpack.c.b16 %v2682, %v2681
    %v2741 = vpack.c.b16 %v2684, %v2683
    %v2742 = vpack.c.b16 %v2686, %v2685
    %v2743 = vpack.c.b16 %v2688, %v2687
    %v2744 = vpack.c.b16 %v2690, %v2689
    %v2745 = vpack.c.b16 %v2692, %v2691
    %v2746 = vpack.c.b16 %v2694, %v2693
    %v2747 = vpack.c.b16 %v2696, %v2695
    %v2748 = vpack.c.b16 %v2698, %v2697
    %v2749 = vpack.c.b16 %v2700, %v2699
    %v2750 = vpack.c.b16 %v2702, %v2701
    %2799 = vmatprep.subr.bf16.mxu0 0
    %2800 = vmatpush1.bf16.msra.mxu0 %v2710
    %2801 = vmatprep.subr.bf16.mxu0 0
    %2802 = vmatpush1.bf16.msra.mxu0 %v2709
    %2803 = vmatprep.subr.bf16.mxu0 0
    %2804 = vmatpush1.bf16.msra.mxu0 %v2708
    %2805 = vmatprep.subr.bf16.mxu0 0
    %2806 = vmatpush1.bf16.msra.mxu0 %v2707
    %2807 = vmatprep.subr.bf16.mxu0 0
    %2808 = vmatpush1.bf16.msra.mxu0 %v2706
    %2809 = vmatprep.subr.bf16.mxu0 0
    %2810 = vmatpush1.bf16.msra.mxu0 %v2705
    %2811 = vmatprep.subr.bf16.mxu0 0
    %2812 = vmatpush1.bf16.msra.mxu0 %v2704
    %2813 = vmatprep.subr.bf16.mxu0 0
    %2814 = vmatpush1.bf16.msra.mxu0 %v2703
    %2815 = vmatprep.subr.bf16.mxu0 0
    %2816 = vmatpush2.bf16.msra.mxu0 %v2718
    %2817 = vmatprep.subr.bf16.mxu0 0
    %2818 = vmatpush2.bf16.msra.mxu0 %v2717
    %2819 = vmatprep.subr.bf16.mxu0 0
    %2820 = vmatpush2.bf16.msra.mxu0 %v2716
    %2821 = vmatprep.subr.bf16.mxu0 0
    %2822 = vmatpush2.bf16.msra.mxu0 %v2715
    %2823 = vmatprep.subr.bf16.mxu0 0
    %2824 = vmatpush2.bf16.msra.mxu0 %v2714
    %2825 = vmatprep.subr.bf16.mxu0 0
    %2826 = vmatpush2.bf16.msra.mxu0 %v2713
    %2827 = vmatprep.subr.bf16.mxu0 0
    %2828 = vmatpush2.bf16.msra.mxu0 %v2712
    %2829 = vmatprep.subr.bf16.mxu0 0
    %2830 = vmatpush2.bf16.msra.mxu0 %v2711
    %2831 = vmatprep.mubr.bf16.mxu0 %v2403
    %2832 = vmatmul.mubr.bf16.gmra.mxu0 %v2402
    %v2833 = vpop.f32.mrf.mxu0
    %v2834 = vadd.f32 %v2509, %v2833
    %v2835 = vpop.f32.mrf.mxu0
    %v2836 = vpop.f32.mrf.mxu0
    %v2837 = vpop.f32.mrf.mxu0
    %2838 = vdwg.mxu0
    %2839 = vmatprep.subr.bf16.mxu0 0
    %2840 = vmatpush1.bf16.msra.mxu0 %v2726
    %2841 = vmatprep.subr.bf16.mxu0 0
    %2842 = vmatpush1.bf16.msra.mxu0 %v2725
    %2843 = vmatprep.subr.bf16.mxu0 0
    %2844 = vmatpush1.bf16.msra.mxu0 %v2724
    %2845 = vmatprep.subr.bf16.mxu0 0
    %2846 = vmatpush1.bf16.msra.mxu0 %v2723
    %2847 = vmatprep.subr.bf16.mxu0 0
    %2848 = vmatpush1.bf16.msra.mxu0 %v2722
    %2849 = vmatprep.subr.bf16.mxu0 0
    %2850 = vmatpush1.bf16.msra.mxu0 %v2721
    %2851 = vmatprep.subr.bf16.mxu0 0
    %2852 = vmatpush1.bf16.msra.mxu0 %v2720
    %2853 = vmatprep.subr.bf16.mxu0 0
    %2854 = vmatpush1.bf16.msra.mxu0 %v2719
    %2855 = vmatprep.subr.bf16.mxu0 0
    %2856 = vmatpush2.bf16.msra.mxu0 %v2734
    %2857 = vmatprep.subr.bf16.mxu0 0
    %2858 = vmatpush2.bf16.msra.mxu0 %v2733
    %2859 = vmatprep.subr.bf16.mxu0 0
    %2860 = vmatpush2.bf16.msra.mxu0 %v2732
    %2861 = vmatprep.subr.bf16.mxu0 0
    %2862 = vmatpush2.bf16.msra.mxu0 %v2731
    %2863 = vmatprep.subr.bf16.mxu0 0
    %2864 = vmatpush2.bf16.msra.mxu0 %v2730
    %2865 = vmatprep.subr.bf16.mxu0 0
    %2866 = vmatpush2.bf16.msra.mxu0 %v2729
    %2867 = vmatprep.subr.bf16.mxu0 0
    %2868 = vmatpush2.bf16.msra.mxu0 %v2728
    %2869 = vmatprep.subr.bf16.mxu0 0
    %2870 = vmatpush2.bf16.msra.mxu0 %v2727
    %2871 = vmatprep.mubr.bf16.mxu0 %v2405
    %2872 = vmatmul.mubr.bf16.gmra.mxu0 %v2404
    %v2873 = vpop.f32.mrf.mxu0
    %v2874 = vadd.f32 %v2834, %v2873
    %v2875 = vpop.f32.mrf.mxu0
    %v2876 = vpop.f32.mrf.mxu0
    %v2877 = vpop.f32.mrf.mxu0
    %2878 = vdwg.mxu0
    %2879 = vmatprep.subr.bf16.mxu0 0
    %2880 = vmatpush1.bf16.msra.mxu0 %v2742
    %2881 = vmatprep.subr.bf16.mxu0 0
    %2882 = vmatpush1.bf16.msra.mxu0 %v2741
    %2883 = vmatprep.subr.bf16.mxu0 0
    %2884 = vmatpush1.bf16.msra.mxu0 %v2740
    %2885 = vmatprep.subr.bf16.mxu0 0
    %2886 = vmatpush1.bf16.msra.mxu0 %v2739
    %2887 = vmatprep.subr.bf16.mxu0 0
    %2888 = vmatpush1.bf16.msra.mxu0 %v2738
    %2889 = vmatprep.subr.bf16.mxu0 0
    %2890 = vmatpush1.bf16.msra.mxu0 %v2737
    %2891 = vmatprep.subr.bf16.mxu0 0
    %2892 = vmatpush1.bf16.msra.mxu0 %v2736
    %2893 = vmatprep.subr.bf16.mxu0 0
    %2894 = vmatpush1.bf16.msra.mxu0 %v2735
    %2895 = vmatprep.subr.bf16.mxu0 0
    %2896 = vmatpush2.bf16.msra.mxu0 %v2750
    %2897 = vmatprep.subr.bf16.mxu0 0
    %2898 = vmatpush2.bf16.msra.mxu0 %v2749
    %2899 = vmatprep.subr.bf16.mxu0 0
    %2900 = vmatpush2.bf16.msra.mxu0 %v2748
    %2901 = vmatprep.subr.bf16.mxu0 0
    %2902 = vmatpush2.bf16.msra.mxu0 %v2747
    %2903 = vmatprep.subr.bf16.mxu0 0
    %2904 = vmatpush2.bf16.msra.mxu0 %v2746
    %2905 = vmatprep.subr.bf16.mxu0 0
    %2906 = vmatpush2.bf16.msra.mxu0 %v2745
    %2907 = vmatprep.subr.bf16.mxu0 0
    %2908 = vmatpush2.bf16.msra.mxu0 %v2744
    %2909 = vmatprep.subr.bf16.mxu0 0
    %2910 = vmatpush2.bf16.msra.mxu0 %v2743
    %2911 = vmatprep.mubr.bf16.mxu0 %v2407
    %2912 = vmatmul.mubr.bf16.gmra.mxu0 %v2406
    %v2913 = vpop.f32.mrf.mxu0
    %v2914 = vadd.f32 %v2874, %v2913
    %v2915 = vpop.f32.mrf.mxu0
    %v2916 = vpop.f32.mrf.mxu0
    %v2917 = vpop.f32.mrf.mxu0
    %2918 = vdwg.mxu0
    %2919 = vst [vmem:[%s7] sm:$0xff] %v2914
    // Predicated region
    $region58: #{linear2head.1} parent=1 // pred_check
      _
    $region59: #{linear2head.1} parent=1 // pred_check_branch
      %2921 = sbr.rel (0) target = $region61
    $region60: #{linear2head.1} parent=1 // pred_region
      _
    $region61: #{linear2head.1} parent=1 // pred_fallthru
      _
    // Predicated region
    $region62: #{linear2head.1} parent=1 // pred_check
      _
    $region63: #{linear2head.1} parent=1 // pred_check_branch
      %2923 = sbr.rel (0) target = $region65
    $region64: #{linear2head.1} parent=1 // pred_region
      _
    $region65: #{linear2head.1} parent=1 // pred_fallthru
      _
    %2924 = vsyncpa [#allocation3], 1
    %2925 = vsyncpa [#allocation5], 1
    %2926 = vsyncpa [#allocation8], 1
    %2927 = vsyncpa [#allocation11], 1

</llo_original>
